<compile_context>
chip_gen: v7x
topology: tpu7x:2x2x1
jax: 0.10.0
libtpu: 0.0.40
codegen_flags: <defaults>
</compile_context>

<pallas_src>
import jax
import jax.numpy as jnp
from jax.experimental import pallas as pl
from jax.experimental.pallas import tpu as pltpu

IN_FEATURES = 6
H1 = 8
H2 = 9
OUT_FEATURES = 2

# Packed-parameter layout: weights in rows [0, MAX_FAN_IN), biases in row MAX_FAN_IN.
MAX_FAN_IN = max(IN_FEATURES, H1, H2)        # 9
BIAS_ROW = MAX_FAN_IN                        # 9
PARAM_ROWS = MAX_FAN_IN + 1                  # 10
C1 = H1                                      # col split after layer-1 params
C2 = H1 + H2                                 # col split after layer-2 params
PARAM_COLS = H1 + H2 + OUT_FEATURES          # 19


def _round_up(n, m):
    return ((n + m - 1) // m) * m


def pack_params(w1, b1, w2, b2, w3, b3):
    """Pack all weights/biases into one small (10, 19) f32 array (done once at init)."""
    p = jnp.zeros((PARAM_ROWS, PARAM_COLS), jnp.float32)
    p = p.at[0:IN_FEATURES, 0:C1].set(w1)            # (6, 8)
    p = p.at[0:H1, C1:C2].set(w2)                    # (8, 9)
    p = p.at[0:H2, C2:PARAM_COLS].set(w3)            # (9, 2)
    p = p.at[BIAS_ROW, 0:C1].set(b1)
    p = p.at[BIAS_ROW, C1:C2].set(b2)
    p = p.at[BIAS_ROW, C2:PARAM_COLS].set(b3)
    return p


def mlp_kernel(p_ref, x_ref, o_ref):
    # Batch-major tile: (tb, in_features). Rows are independent, so garbage rows
    # in the partial last block produce garbage outputs that are never written back.
    x = x_ref[...]                                        # (tb, 6)

    w1 = p_ref[0:IN_FEATURES, 0:C1]                       # (6, 8)
    b1 = p_ref[BIAS_ROW:BIAS_ROW + 1, 0:C1]               # (1, 8)
    w2 = p_ref[0:H1, C1:C2]                               # (8, 9)
    b2 = p_ref[BIAS_ROW:BIAS_ROW + 1, C1:C2]              # (1, 9)
    w3 = p_ref[0:H2, C2:PARAM_COLS]                       # (9, 2)
    b3 = p_ref[BIAS_ROW:BIAS_ROW + 1, C2:PARAM_COLS]      # (1, 2)

    h1 = jnp.maximum(jnp.dot(x, w1, preferred_element_type=jnp.float32) + b1, 0.0)
    h2 = jnp.maximum(jnp.dot(h1, w2, preferred_element_type=jnp.float32) + b2, 0.0)
    y = jnp.dot(h2, w3, preferred_element_type=jnp.float32) + b3

    o_ref[...] = y.astype(o_ref.dtype)


def mlp_forward(x, params, *, tb=None):
    """x: (B, in_features) batch-major. params: packed (10, 19). -> (B, out_features)."""
    B, in_f = x.shape
    out_f = OUT_FEATURES

    if tb is None:
        # Large tiles to amortize per-step overhead, but keep >=2 grid steps so
        # v7x's second TensorCore gets work (harmless on v5e/v6e).
        tb = min(2048, _round_up(pl.cdiv(B, 2), 8))
    tb = max(8, (tb // 8) * 8)            # sublane (8) alignment for the block
    grid = (pl.cdiv(B, tb),)              # partial last block allowed; no batch padding

    cost = pl.CostEstimate(
        flops=2 * B * (IN_FEATURES * H1 + H1 * H2 + H2 * OUT_FEATURES),
        transcendentals=0,
        bytes_accessed=4 * (B * (in_f + out_f) + params.size),
    )

    return pl.pallas_call(
        mlp_kernel,
        out_shape=jax.ShapeDtypeStruct((B, out_f), jnp.float32),
        grid_spec=pltpu.PrefetchScalarGridSpec(
            num_scalar_prefetch=0,
            grid=grid,
            in_specs=[
                # Single packed parameter operand, VMEM-resident across all steps.
                pl.BlockSpec((PARAM_ROWS, PARAM_COLS), lambda i: (0, 0)),
                # x tile, double-buffered along the batch grid.
                pl.BlockSpec((tb, in_f), lambda i: (i, 0)),
            ],
            out_specs=pl.BlockSpec((tb, out_f), lambda i: (i, 0)),
        ),
        compiler_params=pltpu.CompilerParams(
            dimension_semantics=("parallel",),
            vmem_limit_bytes=32 * 1024 * 1024,
        ),
        cost_estimate=cost,
    )(params, x)
    # TODO(synk): optional bf16 streaming of x/params (f32 accumulation kept) would
    # halve HBM input traffic if the model tolerates it numerically.


def init_params(key, in_features=IN_FEATURES, h1=H1, h2=H2, out_features=OUT_FEATURES):
    """Deterministic PyTorch-style (Kaiming-uniform-ish) init."""
    ks = jax.random.split(key, 6)

    def linear_init(kw, kb, fan_in, fan_out):
        bound = 1.0 / jnp.sqrt(fan_in)
        w = jax.random.uniform(kw, (fan_in, fan_out), jnp.float32, -bound, bound)
        b = jax.random.uniform(kb, (fan_out,), jnp.float32, -bound, bound)
        return w, b

    w1, b1 = linear_init(ks[0], ks[1], in_features, h1)
    w2, b2 = linear_init(ks[2], ks[3], h1, h2)
    w3, b3 = linear_init(ks[4], ks[5], h2, out_features)
    return w1, b1, w2, b2, w3, b3


if __name__ == "__main__":
    key = jax.random.PRNGKey(0)
    k_x, k_p = jax.random.split(key)

    B = 1000  # deliberately not tile-aligned: exercises the partial last block
    x = jax.random.normal(k_x, (B, IN_FEATURES), jnp.float32)
    w1, b1, w2, b2, w3, b3 = init_params(k_p)
    params = pack_params(w1, b1, w2, b2, w3, b3)  # one-time packing (init, not per-call)

    out = mlp_forward(x, params)
    jax.block_until_ready(out)

    # Reference check in plain JAX.
    ref = jnp.maximum(x @ w1 + b1, 0.0)
    ref = jnp.maximum(ref @ w2 + b2, 0.0)
    ref = ref @ w3 + b3

    assert out.shape == (B, OUT_FEATURES)
    assert jnp.allclose(out, ref, atol=1e-5, rtol=1e-5)

    print("KERNEL_OK")
</pallas_src>

<mosaic_0001>
module attributes {stable_mosaic.version = 11 : i64} {
  func.func @mlp_kernel(%arg0: i32, %arg1: memref<10x19xf32, #tpu.memory_space<vmem>>, %arg2: memref<504x6xf32, #tpu.memory_space<vmem>>, %arg3: memref<504x2xf32, #tpu.memory_space<vmem>>) attributes {dimension_semantics = [#tpu.dimension_semantics<parallel>], iteration_bounds = array<i64: 2>, scalar_prefetch = 0 : i64, scratch_operands = 0 : i64, tpu.core_type = #tpu.core_type<tc>, window_params = [{pipeline_mode = #tpu.pipeline_mode<synchronous>, transform_indices = @transform_0, window_bounds = array<i64: 10, 19>}, {transform_indices = @transform_1, window_bounds = array<i64: 504, 6>}, {transform_indices = @transform_2, window_bounds = array<i64: 504, 2>}]} {
    %c0 = arith.constant 0 : index
    %c0_0 = arith.constant 0 : index
    %0 = vector.load %arg2[%c0, %c0_0] : memref<504x6xf32, #tpu.memory_space<vmem>>, vector<504x6xf32>
    %c0_1 = arith.constant 0 : index
    %c0_2 = arith.constant 0 : index
    %1 = vector.load %arg1[%c0_1, %c0_2] : memref<10x19xf32, #tpu.memory_space<vmem>>, vector<6x8xf32>
    %c9 = arith.constant 9 : index
    %c0_3 = arith.constant 0 : index
    %2 = vector.load %arg1[%c9, %c0_3] : memref<10x19xf32, #tpu.memory_space<vmem>>, vector<1x8xf32>
    %c0_4 = arith.constant 0 : index
    %c8 = arith.constant 8 : index
    %3 = vector.load %arg1[%c0_4, %c8] : memref<10x19xf32, #tpu.memory_space<vmem>>, vector<8x9xf32>
    %c9_5 = arith.constant 9 : index
    %c8_6 = arith.constant 8 : index
    %4 = vector.load %arg1[%c9_5, %c8_6] : memref<10x19xf32, #tpu.memory_space<vmem>>, vector<1x9xf32>
    %c0_7 = arith.constant 0 : index
    %c17 = arith.constant 17 : index
    %5 = vector.load %arg1[%c0_7, %c17] : memref<10x19xf32, #tpu.memory_space<vmem>>, vector<9x2xf32>
    %c9_8 = arith.constant 9 : index
    %c17_9 = arith.constant 17 : index
    %6 = vector.load %arg1[%c9_8, %c17_9] : memref<10x19xf32, #tpu.memory_space<vmem>>, vector<1x2xf32>
    %cst = arith.constant dense<0.000000e+00> : vector<504x8xf32>
    %7 = tpu.matmul %0, %1, %cst {dimension_numbers = #tpu.dot_dimension_numbers<[1], [0], [0], [1], [0, 0, 1, 1], [], []>} : vector<504x6xf32>, vector<6x8xf32>, vector<504x8xf32> -> vector<504x8xf32>
    %8 = vector.broadcast %2 : vector<1x8xf32> to vector<504x8xf32>
    %9 = arith.addf %7, %8 : vector<504x8xf32>
    %cst_10 = arith.constant 0.000000e+00 : f32
    %10 = vector.broadcast %cst_10 : f32 to vector<504x8xf32>
    %11 = arith.maximumf %9, %10 : vector<504x8xf32>
    %cst_11 = arith.constant dense<0.000000e+00> : vector<504x9xf32>
    %12 = tpu.matmul %11, %3, %cst_11 {dimension_numbers = #tpu.dot_dimension_numbers<[1], [0], [0], [1], [0, 0, 1, 1], [], []>} : vector<504x8xf32>, vector<8x9xf32>, vector<504x9xf32> -> vector<504x9xf32>
    %13 = vector.broadcast %4 : vector<1x9xf32> to vector<504x9xf32>
    %14 = arith.addf %12, %13 : vector<504x9xf32>
    %cst_12 = arith.constant 0.000000e+00 : f32
    %15 = vector.broadcast %cst_12 : f32 to vector<504x9xf32>
    %16 = arith.maximumf %14, %15 : vector<504x9xf32>
    %cst_13 = arith.constant dense<0.000000e+00> : vector<504x2xf32>
    %17 = tpu.matmul %16, %5, %cst_13 {dimension_numbers = #tpu.dot_dimension_numbers<[1], [0], [0], [1], [0, 0, 1, 1], [], []>} : vector<504x9xf32>, vector<9x2xf32>, vector<504x2xf32> -> vector<504x2xf32>
    %18 = vector.broadcast %6 : vector<1x2xf32> to vector<504x2xf32>
    %19 = arith.addf %17, %18 : vector<504x2xf32>
    %c0_14 = arith.constant 0 : index
    %c0_15 = arith.constant 0 : index
    %20 = vector.load %arg3[%c0_14, %c0_15] : memref<504x2xf32, #tpu.memory_space<vmem>>, vector<504x2xf32>
    tpu.vector_store %arg3[%c0_14, %c0_15], %19 {strides = array<i32>} : memref<504x2xf32, #tpu.memory_space<vmem>>, vector<504x2xf32>,
    return
  }
  func.func @transform_0(%arg0: i32) -> (i32, i32) {
    %c0_i32 = arith.constant 0 : i32
    %c0_i32_0 = arith.constant 0 : i32
    %c0_i32_1 = arith.constant 0 : i32
    return %c0_i32, %c0_i32_0 : i32, i32
  }
  func.func @transform_1(%arg0: i32) -> (i32, i32) {
    %c0_i32 = arith.constant 0 : i32
    %c0_i32_0 = arith.constant 0 : i32
    return %arg0, %c0_i32 : i32, i32
  }
  func.func @transform_2(%arg0: i32) -> (i32, i32) {
    %c0_i32 = arith.constant 0 : i32
    %c0_i32_0 = arith.constant 0 : i32
    return %arg0, %c0_i32 : i32, i32
  }
}

</mosaic_0001>

<llo_original>
// kernel: tpu_custom_call.1
$region0: #{tpu_custom_call.1}
  #allocation0 [shape = 'u32[]', space=smem, size = 0x4, offset = 0x4, fixed_abs, tag = 'smem constant byte address 0x4 - core index']
  #allocation1 [shape = 'u32[144,128]{1,0:T(1,128)}', space=vmem, size = 0x12000, scoped, tag = 'internal scratch']
  %s0 = inlined_call_operand.vmem [shape: f32[10,19], index: 0, kind: input, shape index: {}]
  %s1 = inlined_call_operand.vmem [shape: f32[1000,6], index: 1, kind: input, shape index: {}]
  %s2 = inlined_call_operand.vmem [shape: f32[1000,2], index: 2, kind: output, shape index: {}]
  %s3 = sld [smem:[#allocation0]]
  $region89: #{tpu_custom_call.1} parent=0
    _
  %s5 = ssub.s32 1, %s3
  %s6 = scalar_select 0, %s5, %s3
  $region1: #{tpu_custom_call.1} parent=0
    #allocation2 [shape = 'u8[516096]{0}', space=vmem, size = 0x7e000, scoped, tag = 'output window, operand 0']
    loop: start=0, step=1, limit=4
    $region2: #{tpu_custom_call.1} parent=1 // loop_pre_header
      _
    $region3: #{tpu_custom_call.1} parent=1 // loop_header
      %s8 = sphi 0, %s12
      %p9 = scmp.ge.s32.totalorder %s8, 4
      %s16 = sphi 0, %s16
      %s18 = sphi 0, %s16
      %s19 = sphi 0, %s18
      %s33 = sphi 0, %s19
      %s39 = sphi 0, %s41
      %s42 = sphi 0, %s39
      %s43 = sphi 0, %s42
      %s59 = sphi 0, %s43
      %s65 = sphi 0, %s67
      %s68 = sphi 0, %s65
      %s69 = sphi 0, %s68
      %s85 = sphi 0, %s69
    $region4: #{tpu_custom_call.1} parent=1 // loop_header_branch
      %11 = sbr.rel (%p9) target = $region8
    $region5: #{tpu_custom_call.1} parent=1 // loop_body
      %s13 = ssub.s32 %s8, 1
      %s14 = ssub.s32 %s8, 2
      %s15 = sadd.s32 %s8, 1
      %s17 = sadd.s32 %s16, 1
      %p20 = scmp.eq.s32.totalorder %s8, 1
      %p21 = scmp.ne.s32.totalorder %s16, %s18
      %p22 = scmp.eq.s32.totalorder %s8, 0
      %p23 = por %p21, %p22
      %p24 = scmp.ne.s32.totalorder %s16, %s18
      %p25 = scmp.eq.s32.totalorder %s13, 1
      %p26 = por %p24, %p25
      %p27 = scmp.ne.s32.totalorder %s18, %s19
      %p28 = scmp.eq.s32.totalorder %s13, 0
      %p29 = por %p27, %p28
      %p30 = scmp.ne.s32.totalorder %s18, %s19
      %p31 = scmp.eq.s32.totalorder %s14, 1
      %p32 = por %p30, %p31
      %p34 = scmp.ne.s32.totalorder %s19, %s33
      %p35 = scmp.eq.s32.totalorder %s14, 0
      %p36 = por %p34, %p35
      %s37 = ssub.s32 %s8, %s15
      %p38 = scmp.eq.s32.totalorder %s37, 0
      %s40 = sadd.s32 %s39, 1
      %s41 = scalar_select %p38, %s39, %s40
      %p44 = pneg %p38
      %p45 = scmp.eq.s32.totalorder %s8, 1
      %p46 = por %p44, %p45
      %p47 = scmp.ne.s32.totalorder %s39, %s42
      %p48 = scmp.eq.s32.totalorder %s8, 0
      %p49 = por %p47, %p48
      %p50 = scmp.ne.s32.totalorder %s39, %s42
      %p51 = scmp.eq.s32.totalorder %s13, 1
      %p52 = por %p50, %p51
      %p53 = scmp.ne.s32.totalorder %s42, %s43
      %p54 = scmp.eq.s32.totalorder %s13, 0
      %p55 = por %p53, %p54
      %p56 = scmp.ne.s32.totalorder %s42, %s43
      %p57 = scmp.eq.s32.totalorder %s14, 1
      %p58 = por %p56, %p57
      %p60 = scmp.ne.s32.totalorder %s43, %s59
      %p61 = scmp.eq.s32.totalorder %s14, 0
      %p62 = por %p60, %p61
      %s63 = ssub.s32 %s8, %s15
      %p64 = scmp.eq.s32.totalorder %s63, 0
      %s66 = sadd.s32 %s65, 1
      %s67 = scalar_select %p64, %s65, %s66
      %p70 = pneg %p64
      %p71 = scmp.eq.s32.totalorder %s8, 1
      %p72 = por %p70, %p71
      %p73 = scmp.ne.s32.totalorder %s65, %s68
      %p74 = scmp.eq.s32.totalorder %s8, 0
      %p75 = por %p73, %p74
      %p76 = scmp.ne.s32.totalorder %s65, %s68
      %p77 = scmp.eq.s32.totalorder %s13, 1
      %p78 = por %p76, %p77
      %p79 = scmp.ne.s32.totalorder %s68, %s69
      %p80 = scmp.eq.s32.totalorder %s13, 0
      %p81 = por %p79, %p80
      %p82 = scmp.ne.s32.totalorder %s68, %s69
      %p83 = scmp.eq.s32.totalorder %s14, 1
      %p84 = por %p82, %p83
      %p86 = scmp.ne.s32.totalorder %s69, %s85
      %p87 = scmp.eq.s32.totalorder %s14, 0
      %p88 = por %p86, %p87
      %p89 = scmp.le.s32.totalorder 1, %s8
      %p90 = scmp.lt.s32.totalorder %s8, 3
      %p91 = pnand %p89, %p90
      %p92 = pneg %p91
      // Predicated region
      $region9: #{tpu_custom_call.1} parent=5 // pred_check
        _
      $region10: #{tpu_custom_call.1} parent=5 // pred_check_branch
        %94 = sbr.rel (%p91) target = $region12
      $region11: #{tpu_custom_call.1} parent=5 // pred_region
        %s95 = ssub.s32 %s8, 1
        // Predicated region
        $region13: #{tpu_custom_call.1} parent=11 // pred_check
          %p96 = pneg %p29
        $region14: #{tpu_custom_call.1} parent=11 // pred_check_branch
          %98 = sbr.rel (%p96) target = $region16
        $region15: #{tpu_custom_call.1} parent=11 // pred_region
          _
        $region16: #{tpu_custom_call.1} parent=11 // pred_fallthru
          _
      $region12: #{tpu_custom_call.1} parent=5 // pred_fallthru
        _
      %p99 = scmp.lt.s32.totalorder %s8, 2
      // Predicated region
      $region17: #{tpu_custom_call.1} parent=5 // pred_check
        %p100 = pneg %p99
      $region18: #{tpu_custom_call.1} parent=5 // pred_check_branch
        %102 = sbr.rel (%p100) target = $region20
      $region19: #{tpu_custom_call.1} parent=5 // pred_region
        // Predicated region
        $region21: #{tpu_custom_call.1} parent=19 // pred_check
          %p103 = pneg %p49
        $region22: #{tpu_custom_call.1} parent=19 // pred_check_branch
          %105 = sbr.rel (%p103) target = $region24
        $region23: #{tpu_custom_call.1} parent=19 // pred_region
          %s106 = smul.u32 63, %s8
          %s107 = ssub.s32 125, %s106
          %p108 = scmp.lt.s32.totalorder %s107, 63
          %s109 = scalar_select %p108, %s107, 63
          %s110 = smul.u32 128, %s109
          %p111 = scmp.lt.s32.totalorder %s106, 124
          %s112 = scalar_select %p111, %s106, 124
          %s113 = smul.addr %s112, 8
          %s114 = scalar_lea.vmem %s1, %s113
          %s115 = smul.u32 63, %s8
          %s116 = ssub.s32 125, %s115
          %p117 = scmp.lt.s32.totalorder %s116, 63
          %s118 = scalar_select %p117, %s116, 63
          %s119 = smul.u32 128, %s118
        $region24: #{tpu_custom_call.1} parent=19 // pred_fallthru
          _
      $region20: #{tpu_custom_call.1} parent=5 // pred_fallthru
        _
      %p120 = scmp.le.s32.totalorder 1, %s8
      %p121 = scmp.lt.s32.totalorder %s8, 3
      %p122 = pnand %p120, %p121
      %p123 = pneg %p122
      // Predicated region
      $region25: #{tpu_custom_call.1} parent=5 // pred_check
        _
      $region26: #{tpu_custom_call.1} parent=5 // pred_check_branch
        %125 = sbr.rel (%p122) target = $region28
      $region27: #{tpu_custom_call.1} parent=5 // pred_region
        %s126 = ssub.s32 %s8, 1
        %p127 = pneg %p29
        %p128 = pneg %p26
        %s129 = smul.u32 63, %s13
        %s130 = ssub.s32 125, %s129
        %p131 = scmp.lt.s32.totalorder %s130, 63
        %s132 = scalar_select %p131, %s130, 63
        %s133 = smul.u32 128, %s132
        %p134 = scmp.lt.s32.totalorder %s129, 124
        %s135 = scalar_select %p134, %s129, 124
        %s136 = smul.addr %s135, 8
        %s137 = scalar_lea.vmem %s1, %s136
        %p138 = pneg %p55
        %p139 = pneg %p52
        %p140 = pneg %p81
        %p141 = pneg %p78
        %s142 = sand.u32 %s68, 1
        %s143 = sand.u32 %s68, 1
        %s144 = smul.addr %s143, 504
        %s145 = scalar_lea.vmem [#allocation2], %s144
        %s146 = smul.u32 63, %s13
        %s147 = ssub.s32 125, %s146
        %p148 = scmp.lt.s32.totalorder %s147, 63
        %s149 = scalar_select %p148, %s147, 63
        %s150 = smul.u32 128, %s149
        %p151 = scmp.lt.s32.totalorder %s146, 124
        %s152 = scalar_select %p151, %s146, 124
        %s153 = smul.addr %s152, 8
        %s154 = scalar_lea.vmem %s1, %s153
        %s155 = smul.u32 63, %s13
        %s156 = ssub.s32 125, %s155
        %p157 = scmp.lt.s32.totalorder %s156, 63
        %s158 = scalar_select %p157, %s156, 63
        %s159 = smul.u32 128, %s158
        %s160 = smul.u32 63, %s13
        %s161 = ssub.s32 125, %s160
        %p162 = scmp.lt.s32.totalorder %s161, 63
        %s163 = scalar_select %p162, %s161, 63
        %s164 = smul.u32 128, %s163
        %v165 = vld [vmem:[%s154] sm:$0xff]
        %v166 = vld [vmem:[%s154 + $0x8] sm:$0xff]
        %v167 = vld [vmem:[%s154 + $0x10] sm:$0xff]
        %v168 = vld [vmem:[%s154 + $0x18] sm:$0xff]
        %v169 = vld [vmem:[%s154 + $0x20] sm:$0xff]
        %v170 = vld [vmem:[%s154 + $0x28] sm:$0xff]
        %v171 = vld [vmem:[%s154 + $0x30] sm:$0xff]
        %v172 = vld [vmem:[%s154 + $0x38] sm:$0xff]
        %v173 = vld [vmem:[%s154 + $0x40] sm:$0xff]
        %v174 = vld [vmem:[%s154 + $0x48] sm:$0xff]
        %v175 = vld [vmem:[%s154 + $0x50] sm:$0xff]
        %v176 = vld [vmem:[%s154 + $0x58] sm:$0xff]
        %v177 = vld [vmem:[%s154 + $0x60] sm:$0xff]
        %v178 = vld [vmem:[%s154 + $0x68] sm:$0xff]
        %v179 = vld [vmem:[%s154 + $0x70] sm:$0xff]
        %v180 = vld [vmem:[%s154 + $0x78] sm:$0xff]
        %v181 = vld [vmem:[%s154 + $0x80] sm:$0xff]
        %v182 = vld [vmem:[%s154 + $0x88] sm:$0xff]
        %v183 = vld [vmem:[%s154 + $0x90] sm:$0xff]
        %v184 = vld [vmem:[%s154 + $0x98] sm:$0xff]
        %v185 = vld [vmem:[%s154 + $0xa0] sm:$0xff]
        %v186 = vld [vmem:[%s154 + $0xa8] sm:$0xff]
        %v187 = vld [vmem:[%s154 + $0xb0] sm:$0xff]
        %v188 = vld [vmem:[%s154 + $0xb8] sm:$0xff]
        %v189 = vld [vmem:[%s154 + $0xc0] sm:$0xff]
        %v190 = vld [vmem:[%s154 + $0xc8] sm:$0xff]
        %v191 = vld [vmem:[%s154 + $0xd0] sm:$0xff]
        %v192 = vld [vmem:[%s154 + $0xd8] sm:$0xff]
        %v193 = vld [vmem:[%s154 + $0xe0] sm:$0xff]
        %v194 = vld [vmem:[%s154 + $0xe8] sm:$0xff]
        %v195 = vld [vmem:[%s154 + $0xf0] sm:$0xff]
        %v196 = vld [vmem:[%s154 + $0xf8] sm:$0xff]
        %v197 = vld [vmem:[%s154 + $0x100] sm:$0xff]
        %v198 = vld [vmem:[%s154 + $0x108] sm:$0xff]
        %v199 = vld [vmem:[%s154 + $0x110] sm:$0xff]
        %v200 = vld [vmem:[%s154 + $0x118] sm:$0xff]
        %v201 = vld [vmem:[%s154 + $0x120] sm:$0xff]
        %v202 = vld [vmem:[%s154 + $0x128] sm:$0xff]
        %v203 = vld [vmem:[%s154 + $0x130] sm:$0xff]
        %v204 = vld [vmem:[%s154 + $0x138] sm:$0xff]
        %v205 = vld [vmem:[%s154 + $0x140] sm:$0xff]
        %v206 = vld [vmem:[%s154 + $0x148] sm:$0xff]
        %v207 = vld [vmem:[%s154 + $0x150] sm:$0xff]
        %v208 = vld [vmem:[%s154 + $0x158] sm:$0xff]
        %v209 = vld [vmem:[%s154 + $0x160] sm:$0xff]
        %v210 = vld [vmem:[%s154 + $0x168] sm:$0xff]
        %v211 = vld [vmem:[%s154 + $0x170] sm:$0xff]
        %v212 = vld [vmem:[%s154 + $0x178] sm:$0xff]
        %v213 = vld [vmem:[%s154 + $0x180] sm:$0xff]
        %v214 = vld [vmem:[%s154 + $0x188] sm:$0xff]
        %v215 = vld [vmem:[%s154 + $0x190] sm:$0xff]
        %v216 = vld [vmem:[%s154 + $0x198] sm:$0xff]
        %v217 = vld [vmem:[%s154 + $0x1a0] sm:$0xff]
        %v218 = vld [vmem:[%s154 + $0x1a8] sm:$0xff]
        %v219 = vld [vmem:[%s154 + $0x1b0] sm:$0xff]
        %v220 = vld [vmem:[%s154 + $0x1b8] sm:$0xff]
        %v221 = vld [vmem:[%s154 + $0x1c0] sm:$0xff]
        %v222 = vld [vmem:[%s154 + $0x1c8] sm:$0xff]
        %v223 = vld [vmem:[%s154 + $0x1d0] sm:$0xff]
        %v224 = vld [vmem:[%s154 + $0x1d8] sm:$0xff]
        %v225 = vld [vmem:[%s154 + $0x1e0] sm:$0xff]
        %v226 = vld [vmem:[%s154 + $0x1e8] sm:$0xff]
        %v227 = vld [vmem:[%s154 + $0x1f0] sm:$0xff]
        %v228 = vld [vmem:[%s0] sm:$0x3f]
        %v229 = vld [vmem:[%s0 + $0x9] sm:$0x1]
        %v230 = vld [vmem:[%s0] sm:$0xff]
        %v231 = vld [vmem:[%s0 + $0x8] sm:$0x1]
        %v232 = vlaneseq
        %v233 = vshrl.u32 %v232, 7
        %v234 = vsub.s32 0, %v233
        %v235 = vrot.slane %v229, %v234
        %vm236 = vcmask 48128
        %v238 = vsel %vm236, %v165, 0
        %v241 = vsel %vm236, %v166, 0
        %v244 = vsel %vm236, %v167, 0
        %v247 = vsel %vm236, %v168, 0
        %v250 = vsel %vm236, %v169, 0
        %v253 = vsel %vm236, %v170, 0
        %v256 = vsel %vm236, %v171, 0
        %v259 = vsel %vm236, %v172, 0
        %v262 = vsel %vm236, %v173, 0
        %v265 = vsel %vm236, %v174, 0
        %v268 = vsel %vm236, %v175, 0
        %v271 = vsel %vm236, %v176, 0
        %v274 = vsel %vm236, %v177, 0
        %v277 = vsel %vm236, %v178, 0
        %v280 = vsel %vm236, %v179, 0
        %v283 = vsel %vm236, %v180, 0
        %v286 = vsel %vm236, %v181, 0
        %v289 = vsel %vm236, %v182, 0
        %v292 = vsel %vm236, %v183, 0
        %v295 = vsel %vm236, %v184, 0
        %v298 = vsel %vm236, %v185, 0
        %v301 = vsel %vm236, %v186, 0
        %v304 = vsel %vm236, %v187, 0
        %v307 = vsel %vm236, %v188, 0
        %v310 = vsel %vm236, %v189, 0
        %v313 = vsel %vm236, %v190, 0
        %v316 = vsel %vm236, %v191, 0
        %v319 = vsel %vm236, %v192, 0
        %v322 = vsel %vm236, %v193, 0
        %v325 = vsel %vm236, %v194, 0
        %v328 = vsel %vm236, %v195, 0
        %v331 = vsel %vm236, %v196, 0
        %v334 = vsel %vm236, %v197, 0
        %v337 = vsel %vm236, %v198, 0
        %v340 = vsel %vm236, %v199, 0
        %v343 = vsel %vm236, %v200, 0
        %v346 = vsel %vm236, %v201, 0
        %v349 = vsel %vm236, %v202, 0
        %v352 = vsel %vm236, %v203, 0
        %v355 = vsel %vm236, %v204, 0
        %v358 = vsel %vm236, %v205, 0
        %v361 = vsel %vm236, %v206, 0
        %v364 = vsel %vm236, %v207, 0
        %v367 = vsel %vm236, %v208, 0
        %v370 = vsel %vm236, %v209, 0
        %v373 = vsel %vm236, %v210, 0
        %v376 = vsel %vm236, %v211, 0
        %v379 = vsel %vm236, %v212, 0
        %v382 = vsel %vm236, %v213, 0
        %v385 = vsel %vm236, %v214, 0
        %v388 = vsel %vm236, %v215, 0
        %v391 = vsel %vm236, %v216, 0
        %v394 = vsel %vm236, %v217, 0
        %v397 = vsel %vm236, %v218, 0
        %v400 = vsel %vm236, %v219, 0
        %v403 = vsel %vm236, %v220, 0
        %v406 = vsel %vm236, %v221, 0
        %v409 = vsel %vm236, %v222, 0
        %v412 = vsel %vm236, %v223, 0
        %v415 = vsel %vm236, %v224, 0
        %v418 = vsel %vm236, %v225, 0
        %v421 = vsel %vm236, %v226, 0
        %v424 = vsel %vm236, %v227, 0
        %vm426 = vcmask 1045504
        %v428 = vsel %vm426, %v228, 0
        %430 = vmatprep.subr.mxu0 0.0
        %431 = vmatpush1.msra.mxu0 %v428
        %432 = vmatprep.subr.mxu0 0.0
        %433 = vmatpush1.msra.mxu0 0.0
        %434 = vmatprep.subr.mxu0 0.0
        %435 = vmatpush1.msra.mxu0 0.0
        %436 = vmatprep.subr.mxu0 0.0
        %437 = vmatpush1.msra.mxu0 0.0
        %438 = vmatprep.subr.mxu0 0.0
        %439 = vmatpush1.msra.mxu0 0.0
        %440 = vmatprep.subr.mxu0 0.0
        %441 = vmatpush1.msra.mxu0 0.0
        %442 = vmatprep.subr.mxu0 0.0
        %443 = vmatpush1.msra.mxu0 0.0
        %444 = vmatprep.subr.mxu0 0.0
        %445 = vmatpush1.msra.mxu0 0.0
        %446 = vmatprep.subr.mxu0 0.0
        %447 = vmatpush1.msra.mxu0 0.0
        %448 = vmatprep.subr.mxu0 0.0
        %449 = vmatpush1.msra.mxu0 0.0
        %450 = vmatprep.subr.mxu0 0.0
        %451 = vmatpush1.msra.mxu0 0.0
        %452 = vmatprep.subr.mxu0 0.0
        %453 = vmatpush1.msra.mxu0 0.0
        %454 = vmatprep.subr.mxu0 0.0
        %455 = vmatpush1.msra.mxu0 0.0
        %456 = vmatprep.subr.mxu0 0.0
        %457 = vmatpush1.msra.mxu0 0.0
        %458 = vmatprep.subr.mxu0 0.0
        %459 = vmatpush1.msra.mxu0 0.0
        %460 = vmatprep.subr.mxu0 0.0
        %461 = vmatpush1.msra.mxu0 0.0
        %462 = vmatprep.subr.mxu0 0.0
        %463 = vmatpush1.msra.mxu0 0.0
        %464 = vmatprep.subr.mxu0 0.0
        %465 = vmatpush1.msra.mxu0 0.0
        %466 = vmatprep.subr.mxu0 0.0
        %467 = vmatpush1.msra.mxu0 0.0
        %468 = vmatprep.subr.mxu0 0.0
        %469 = vmatpush1.msra.mxu0 0.0
        %470 = vmatprep.subr.mxu0 0.0
        %471 = vmatpush1.msra.mxu0 0.0
        %472 = vmatprep.subr.mxu0 0.0
        %473 = vmatpush1.msra.mxu0 0.0
        %474 = vmatprep.subr.mxu0 0.0
        %475 = vmatpush1.msra.mxu0 0.0
        %476 = vmatprep.subr.mxu0 0.0
        %477 = vmatpush1.msra.mxu0 0.0
        %478 = vmatprep.subr.mxu0 0.0
        %479 = vmatpush1.msra.mxu0 0.0
        %480 = vmatprep.subr.mxu0 0.0
        %481 = vmatpush1.msra.mxu0 0.0
        %482 = vmatprep.subr.mxu0 0.0
        %483 = vmatpush1.msra.mxu0 0.0
        %484 = vmatprep.subr.mxu0 0.0
        %485 = vmatpush1.msra.mxu0 0.0
        %486 = vmatprep.subr.mxu0 0.0
        %487 = vmatpush1.msra.mxu0 0.0
        %488 = vmatprep.subr.mxu0 0.0
        %489 = vmatpush1.msra.mxu0 0.0
        %490 = vmatprep.subr.mxu0 0.0
        %491 = vmatpush1.msra.mxu0 0.0
        %492 = vmatprep.subr.mxu0 0.0
        %493 = vmatpush1.msra.mxu0 0.0
        %494 = vmatprep.mubr.f32.mxu0 0.0
        %495 = vmatmul.mubr.f32.gmra.mrb[0].mxu0 %v238
        %v496 = vpop.f32.mrb[0].mxu0
        %v497 = vadd.f32 %v235, %v496
        %v498 = vpop.f32.mrb[0].mxu0
        %499 = vmatprep.mubr.f32.mxu0 0.0
        %500 = vmatmul.mubr.f32.gmra.mrb[0].mxu0 %v241
        %v501 = vpop.f32.mrb[0].mxu0
        %v502 = vadd.f32 %v235, %v501
        %v503 = vpop.f32.mrb[0].mxu0
        %504 = vmatprep.mubr.f32.mxu0 0.0
        %505 = vmatmul.mubr.f32.gmra.mrb[0].mxu0 %v244
        %v506 = vpop.f32.mrb[0].mxu0
        %v507 = vadd.f32 %v235, %v506
        %v508 = vpop.f32.mrb[0].mxu0
        %509 = vmatprep.mubr.f32.mxu0 0.0
        %510 = vmatmul.mubr.f32.gmra.mrb[0].mxu0 %v247
        %v511 = vpop.f32.mrb[0].mxu0
        %v512 = vadd.f32 %v235, %v511
        %v513 = vpop.f32.mrb[0].mxu0
        %514 = vmatprep.mubr.f32.mxu0 0.0
        %515 = vmatmul.mubr.f32.gmra.mrb[0].mxu0 %v250
        %v516 = vpop.f32.mrb[0].mxu0
        %v517 = vadd.f32 %v235, %v516
        %v518 = vpop.f32.mrb[0].mxu0
        %519 = vmatprep.mubr.f32.mxu0 0.0
        %520 = vmatmul.mubr.f32.gmra.mrb[0].mxu0 %v253
        %v521 = vpop.f32.mrb[0].mxu0
        %v522 = vadd.f32 %v235, %v521
        %v523 = vpop.f32.mrb[0].mxu0
        %524 = vmatprep.mubr.f32.mxu0 0.0
        %525 = vmatmul.mubr.f32.gmra.mrb[0].mxu0 %v256
        %v526 = vpop.f32.mrb[0].mxu0
        %v527 = vadd.f32 %v235, %v526
        %v528 = vpop.f32.mrb[0].mxu0
        %529 = vmatprep.mubr.f32.mxu0 0.0
        %530 = vmatmul.mubr.f32.gmra.mrb[0].mxu0 %v259
        %v531 = vpop.f32.mrb[0].mxu0
        %v532 = vadd.f32 %v235, %v531
        %v533 = vpop.f32.mrb[0].mxu0
        %534 = vmatprep.mubr.f32.mxu0 0.0
        %535 = vmatmul.mubr.f32.gmra.mrb[0].mxu0 %v262
        %v536 = vpop.f32.mrb[0].mxu0
        %v537 = vadd.f32 %v235, %v536
        %v538 = vpop.f32.mrb[0].mxu0
        %539 = vmatprep.mubr.f32.mxu0 0.0
        %540 = vmatmul.mubr.f32.gmra.mrb[0].mxu0 %v265
        %v541 = vpop.f32.mrb[0].mxu0
        %v542 = vadd.f32 %v235, %v541
        %v543 = vpop.f32.mrb[0].mxu0
        %544 = vmatprep.mubr.f32.mxu0 0.0
        %545 = vmatmul.mubr.f32.gmra.mrb[0].mxu0 %v268
        %v546 = vpop.f32.mrb[0].mxu0
        %v547 = vadd.f32 %v235, %v546
        %v548 = vpop.f32.mrb[0].mxu0
        %549 = vmatprep.mubr.f32.mxu0 0.0
        %550 = vmatmul.mubr.f32.gmra.mrb[0].mxu0 %v271
        %v551 = vpop.f32.mrb[0].mxu0
        %v552 = vadd.f32 %v235, %v551
        %v553 = vpop.f32.mrb[0].mxu0
        %554 = vmatprep.mubr.f32.mxu0 0.0
        %555 = vmatmul.mubr.f32.gmra.mrb[0].mxu0 %v274
        %v556 = vpop.f32.mrb[0].mxu0
        %v557 = vadd.f32 %v235, %v556
        %v558 = vpop.f32.mrb[0].mxu0
        %559 = vmatprep.mubr.f32.mxu0 0.0
        %560 = vmatmul.mubr.f32.gmra.mrb[0].mxu0 %v277
        %v561 = vpop.f32.mrb[0].mxu0
        %v562 = vadd.f32 %v235, %v561
        %v563 = vpop.f32.mrb[0].mxu0
        %564 = vmatprep.mubr.f32.mxu0 0.0
        %565 = vmatmul.mubr.f32.gmra.mrb[0].mxu0 %v280
        %v566 = vpop.f32.mrb[0].mxu0
        %v567 = vadd.f32 %v235, %v566
        %v568 = vpop.f32.mrb[0].mxu0
        %569 = vmatprep.mubr.f32.mxu0 0.0
        %570 = vmatmul.mubr.f32.gmra.mrb[0].mxu0 %v283
        %v571 = vpop.f32.mrb[0].mxu0
        %v572 = vadd.f32 %v235, %v571
        %v573 = vpop.f32.mrb[0].mxu0
        %574 = vmatprep.mubr.f32.mxu0 0.0
        %575 = vmatmul.mubr.f32.gmra.mrb[0].mxu0 %v286
        %v576 = vpop.f32.mrb[0].mxu0
        %v577 = vadd.f32 %v235, %v576
        %v578 = vpop.f32.mrb[0].mxu0
        %579 = vmatprep.mubr.f32.mxu0 0.0
        %580 = vmatmul.mubr.f32.gmra.mrb[0].mxu0 %v289
        %v581 = vpop.f32.mrb[0].mxu0
        %v582 = vadd.f32 %v235, %v581
        %v583 = vpop.f32.mrb[0].mxu0
        %584 = vmatprep.mubr.f32.mxu0 0.0
        %585 = vmatmul.mubr.f32.gmra.mrb[0].mxu0 %v292
        %v586 = vpop.f32.mrb[0].mxu0
        %v587 = vadd.f32 %v235, %v586
        %v588 = vpop.f32.mrb[0].mxu0
        %589 = vmatprep.mubr.f32.mxu0 0.0
        %590 = vmatmul.mubr.f32.gmra.mrb[0].mxu0 %v295
        %v591 = vpop.f32.mrb[0].mxu0
        %v592 = vadd.f32 %v235, %v591
        %v593 = vpop.f32.mrb[0].mxu0
        %594 = vmatprep.mubr.f32.mxu0 0.0
        %595 = vmatmul.mubr.f32.gmra.mrb[0].mxu0 %v298
        %v596 = vpop.f32.mrb[0].mxu0
        %v597 = vadd.f32 %v235, %v596
        %v598 = vpop.f32.mrb[0].mxu0
        %599 = vmatprep.mubr.f32.mxu0 0.0
        %600 = vmatmul.mubr.f32.gmra.mrb[0].mxu0 %v301
        %v601 = vpop.f32.mrb[0].mxu0
        %v602 = vadd.f32 %v235, %v601
        %v603 = vpop.f32.mrb[0].mxu0
        %604 = vmatprep.mubr.f32.mxu0 0.0
        %605 = vmatmul.mubr.f32.gmra.mrb[0].mxu0 %v304
        %v606 = vpop.f32.mrb[0].mxu0
        %v607 = vadd.f32 %v235, %v606
        %v608 = vpop.f32.mrb[0].mxu0
        %609 = vmatprep.mubr.f32.mxu0 0.0
        %610 = vmatmul.mubr.f32.gmra.mrb[0].mxu0 %v307
        %v611 = vpop.f32.mrb[0].mxu0
        %v612 = vadd.f32 %v235, %v611
        %v613 = vpop.f32.mrb[0].mxu0
        %614 = vmatprep.mubr.f32.mxu0 0.0
        %615 = vmatmul.mubr.f32.gmra.mrb[0].mxu0 %v310
        %v616 = vpop.f32.mrb[0].mxu0
        %v617 = vadd.f32 %v235, %v616
        %v618 = vpop.f32.mrb[0].mxu0
        %619 = vmatprep.mubr.f32.mxu0 0.0
        %620 = vmatmul.mubr.f32.gmra.mrb[0].mxu0 %v313
        %v621 = vpop.f32.mrb[0].mxu0
        %v622 = vadd.f32 %v235, %v621
        %v623 = vpop.f32.mrb[0].mxu0
        %624 = vmatprep.mubr.f32.mxu0 0.0
        %625 = vmatmul.mubr.f32.gmra.mrb[0].mxu0 %v316
        %v626 = vpop.f32.mrb[0].mxu0
        %v627 = vadd.f32 %v235, %v626
        %v628 = vpop.f32.mrb[0].mxu0
        %629 = vmatprep.mubr.f32.mxu0 0.0
        %630 = vmatmul.mubr.f32.gmra.mrb[0].mxu0 %v319
        %v631 = vpop.f32.mrb[0].mxu0
        %v632 = vadd.f32 %v235, %v631
        %v633 = vpop.f32.mrb[0].mxu0
        %634 = vmatprep.mubr.f32.mxu0 0.0
        %635 = vmatmul.mubr.f32.gmra.mrb[0].mxu0 %v322
        %v636 = vpop.f32.mrb[0].mxu0
        %v637 = vadd.f32 %v235, %v636
        %v638 = vpop.f32.mrb[0].mxu0
        %639 = vmatprep.mubr.f32.mxu0 0.0
        %640 = vmatmul.mubr.f32.gmra.mrb[0].mxu0 %v325
        %v641 = vpop.f32.mrb[0].mxu0
        %v642 = vadd.f32 %v235, %v641
        %v643 = vpop.f32.mrb[0].mxu0
        %644 = vmatprep.mubr.f32.mxu0 0.0
        %645 = vmatmul.mubr.f32.gmra.mrb[0].mxu0 %v328
        %v646 = vpop.f32.mrb[0].mxu0
        %v647 = vadd.f32 %v235, %v646
        %v648 = vpop.f32.mrb[0].mxu0
        %649 = vmatprep.mubr.f32.mxu0 0.0
        %650 = vmatmul.mubr.f32.gmra.mrb[0].mxu0 %v331
        %v651 = vpop.f32.mrb[0].mxu0
        %v652 = vadd.f32 %v235, %v651
        %v653 = vpop.f32.mrb[0].mxu0
        %654 = vmatprep.mubr.f32.mxu0 0.0
        %655 = vmatmul.mubr.f32.gmra.mrb[0].mxu0 %v334
        %v656 = vpop.f32.mrb[0].mxu0
        %v657 = vadd.f32 %v235, %v656
        %v658 = vpop.f32.mrb[0].mxu0
        %659 = vmatprep.mubr.f32.mxu0 0.0
        %660 = vmatmul.mubr.f32.gmra.mrb[0].mxu0 %v337
        %v661 = vpop.f32.mrb[0].mxu0
        %v662 = vadd.f32 %v235, %v661
        %v663 = vpop.f32.mrb[0].mxu0
        %664 = vmatprep.mubr.f32.mxu0 0.0
        %665 = vmatmul.mubr.f32.gmra.mrb[0].mxu0 %v340
        %v666 = vpop.f32.mrb[0].mxu0
        %v667 = vadd.f32 %v235, %v666
        %v668 = vpop.f32.mrb[0].mxu0
        %669 = vmatprep.mubr.f32.mxu0 0.0
        %670 = vmatmul.mubr.f32.gmra.mrb[0].mxu0 %v343
        %v671 = vpop.f32.mrb[0].mxu0
        %v672 = vadd.f32 %v235, %v671
        %v673 = vpop.f32.mrb[0].mxu0
        %674 = vmatprep.mubr.f32.mxu0 0.0
        %675 = vmatmul.mubr.f32.gmra.mrb[0].mxu0 %v346
        %v676 = vpop.f32.mrb[0].mxu0
        %v677 = vadd.f32 %v235, %v676
        %v678 = vpop.f32.mrb[0].mxu0
        %679 = vmatprep.mubr.f32.mxu0 0.0
        %680 = vmatmul.mubr.f32.gmra.mrb[0].mxu0 %v349
        %v681 = vpop.f32.mrb[0].mxu0
        %v682 = vadd.f32 %v235, %v681
        %v683 = vpop.f32.mrb[0].mxu0
        %684 = vmatprep.mubr.f32.mxu0 0.0
        %685 = vmatmul.mubr.f32.gmra.mrb[0].mxu0 %v352
        %v686 = vpop.f32.mrb[0].mxu0
        %v687 = vadd.f32 %v235, %v686
        %v688 = vpop.f32.mrb[0].mxu0
        %689 = vmatprep.mubr.f32.mxu0 0.0
        %690 = vmatmul.mubr.f32.gmra.mrb[0].mxu0 %v355
        %v691 = vpop.f32.mrb[0].mxu0
        %v692 = vadd.f32 %v235, %v691
        %v693 = vpop.f32.mrb[0].mxu0
        %694 = vmatprep.mubr.f32.mxu0 0.0
        %695 = vmatmul.mubr.f32.gmra.mrb[0].mxu0 %v358
        %v696 = vpop.f32.mrb[0].mxu0
        %v697 = vadd.f32 %v235, %v696
        %v698 = vpop.f32.mrb[0].mxu0
        %699 = vmatprep.mubr.f32.mxu0 0.0
        %700 = vmatmul.mubr.f32.gmra.mrb[0].mxu0 %v361
        %v701 = vpop.f32.mrb[0].mxu0
        %v702 = vadd.f32 %v235, %v701
        %v703 = vpop.f32.mrb[0].mxu0
        %704 = vmatprep.mubr.f32.mxu0 0.0
        %705 = vmatmul.mubr.f32.gmra.mrb[0].mxu0 %v364
        %v706 = vpop.f32.mrb[0].mxu0
        %v707 = vadd.f32 %v235, %v706
        %v708 = vpop.f32.mrb[0].mxu0
        %709 = vmatprep.mubr.f32.mxu0 0.0
        %710 = vmatmul.mubr.f32.gmra.mrb[0].mxu0 %v367
        %v711 = vpop.f32.mrb[0].mxu0
        %v712 = vadd.f32 %v235, %v711
        %v713 = vpop.f32.mrb[0].mxu0
        %714 = vmatprep.mubr.f32.mxu0 0.0
        %715 = vmatmul.mubr.f32.gmra.mrb[0].mxu0 %v370
        %v716 = vpop.f32.mrb[0].mxu0
        %v717 = vadd.f32 %v235, %v716
        %v718 = vpop.f32.mrb[0].mxu0
        %719 = vmatprep.mubr.f32.mxu0 0.0
        %720 = vmatmul.mubr.f32.gmra.mrb[0].mxu0 %v373
        %v721 = vpop.f32.mrb[0].mxu0
        %v722 = vadd.f32 %v235, %v721
        %v723 = vpop.f32.mrb[0].mxu0
        %724 = vmatprep.mubr.f32.mxu0 0.0
        %725 = vmatmul.mubr.f32.gmra.mrb[0].mxu0 %v376
        %v726 = vpop.f32.mrb[0].mxu0
        %v727 = vadd.f32 %v235, %v726
        %v728 = vpop.f32.mrb[0].mxu0
        %729 = vmatprep.mubr.f32.mxu0 0.0
        %730 = vmatmul.mubr.f32.gmra.mrb[0].mxu0 %v379
        %v731 = vpop.f32.mrb[0].mxu0
        %v732 = vadd.f32 %v235, %v731
        %v733 = vpop.f32.mrb[0].mxu0
        %734 = vmatprep.mubr.f32.mxu0 0.0
        %735 = vmatmul.mubr.f32.gmra.mrb[0].mxu0 %v382
        %v736 = vpop.f32.mrb[0].mxu0
        %v737 = vadd.f32 %v235, %v736
        %v738 = vpop.f32.mrb[0].mxu0
        %739 = vmatprep.mubr.f32.mxu0 0.0
        %740 = vmatmul.mubr.f32.gmra.mrb[0].mxu0 %v385
        %v741 = vpop.f32.mrb[0].mxu0
        %v742 = vadd.f32 %v235, %v741
        %v743 = vpop.f32.mrb[0].mxu0
        %744 = vmatprep.mubr.f32.mxu0 0.0
        %745 = vmatmul.mubr.f32.gmra.mrb[0].mxu0 %v388
        %v746 = vpop.f32.mrb[0].mxu0
        %v747 = vadd.f32 %v235, %v746
        %v748 = vpop.f32.mrb[0].mxu0
        %749 = vmatprep.mubr.f32.mxu0 0.0
        %750 = vmatmul.mubr.f32.gmra.mrb[0].mxu0 %v391
        %v751 = vpop.f32.mrb[0].mxu0
        %v752 = vadd.f32 %v235, %v751
        %v753 = vpop.f32.mrb[0].mxu0
        %754 = vmatprep.mubr.f32.mxu0 0.0
        %755 = vmatmul.mubr.f32.gmra.mrb[0].mxu0 %v394
        %v756 = vpop.f32.mrb[0].mxu0
        %v757 = vadd.f32 %v235, %v756
        %v758 = vpop.f32.mrb[0].mxu0
        %759 = vmatprep.mubr.f32.mxu0 0.0
        %760 = vmatmul.mubr.f32.gmra.mrb[0].mxu0 %v397
        %v761 = vpop.f32.mrb[0].mxu0
        %v762 = vadd.f32 %v235, %v761
        %v763 = vpop.f32.mrb[0].mxu0
        %764 = vmatprep.mubr.f32.mxu0 0.0
        %765 = vmatmul.mubr.f32.gmra.mrb[0].mxu0 %v400
        %v766 = vpop.f32.mrb[0].mxu0
        %v767 = vadd.f32 %v235, %v766
        %v768 = vpop.f32.mrb[0].mxu0
        %769 = vmatprep.mubr.f32.mxu0 0.0
        %770 = vmatmul.mubr.f32.gmra.mrb[0].mxu0 %v403
        %v771 = vpop.f32.mrb[0].mxu0
        %v772 = vadd.f32 %v235, %v771
        %v773 = vpop.f32.mrb[0].mxu0
        %774 = vmatprep.mubr.f32.mxu0 0.0
        %775 = vmatmul.mubr.f32.gmra.mrb[0].mxu0 %v406
        %v776 = vpop.f32.mrb[0].mxu0
        %v777 = vadd.f32 %v235, %v776
        %v778 = vpop.f32.mrb[0].mxu0
        %779 = vmatprep.mubr.f32.mxu0 0.0
        %780 = vmatmul.mubr.f32.gmra.mrb[0].mxu0 %v409
        %v781 = vpop.f32.mrb[0].mxu0
        %v782 = vadd.f32 %v235, %v781
        %v783 = vpop.f32.mrb[0].mxu0
        %784 = vmatprep.mubr.f32.mxu0 0.0
        %785 = vmatmul.mubr.f32.gmra.mrb[0].mxu0 %v412
        %v786 = vpop.f32.mrb[0].mxu0
        %v787 = vadd.f32 %v235, %v786
        %v788 = vpop.f32.mrb[0].mxu0
        %789 = vmatprep.mubr.f32.mxu0 0.0
        %790 = vmatmul.mubr.f32.gmra.mrb[0].mxu0 %v415
        %v791 = vpop.f32.mrb[0].mxu0
        %v792 = vadd.f32 %v235, %v791
        %v793 = vpop.f32.mrb[0].mxu0
        %794 = vmatprep.mubr.f32.mxu0 0.0
        %795 = vmatmul.mubr.f32.gmra.mrb[0].mxu0 %v418
        %v796 = vpop.f32.mrb[0].mxu0
        %v797 = vadd.f32 %v235, %v796
        %v798 = vpop.f32.mrb[0].mxu0
        %799 = vmatprep.mubr.f32.mxu0 0.0
        %800 = vmatmul.mubr.f32.gmra.mrb[0].mxu0 %v421
        %v801 = vpop.f32.mrb[0].mxu0
        %v802 = vadd.f32 %v235, %v801
        %v803 = vpop.f32.mrb[0].mxu0
        %804 = vmatprep.mubr.f32.mxu0 0.0
        %805 = vmatmul.mubr.f32.gmra.mrb[0].mxu0 %v424
        %v806 = vpop.f32.mrb[0].mxu0
        %v807 = vadd.f32 %v235, %v806
        %v808 = vpop.f32.mrb[0].mxu0
        %809 = vdwg.mxu0
        %v810 = vmax.f32 %v497, 0.0
        %v811 = vmax.f32 %v502, 0.0
        %v812 = vmax.f32 %v507, 0.0
        %v813 = vmax.f32 %v512, 0.0
        %v814 = vmax.f32 %v517, 0.0
        %v815 = vmax.f32 %v522, 0.0
        %v816 = vmax.f32 %v527, 0.0
        %v817 = vmax.f32 %v532, 0.0
        %v818 = vmax.f32 %v537, 0.0
        %v819 = vmax.f32 %v542, 0.0
        %v820 = vmax.f32 %v547, 0.0
        %v821 = vmax.f32 %v552, 0.0
        %v822 = vmax.f32 %v557, 0.0
        %v823 = vmax.f32 %v562, 0.0
        %v824 = vmax.f32 %v567, 0.0
        %v825 = vmax.f32 %v572, 0.0
        %v826 = vmax.f32 %v577, 0.0
        %v827 = vmax.f32 %v582, 0.0
        %v828 = vmax.f32 %v587, 0.0
        %v829 = vmax.f32 %v592, 0.0
        %v830 = vmax.f32 %v597, 0.0
        %v831 = vmax.f32 %v602, 0.0
        %v832 = vmax.f32 %v607, 0.0
        %v833 = vmax.f32 %v612, 0.0
        %v834 = vmax.f32 %v617, 0.0
        %v835 = vmax.f32 %v622, 0.0
        %v836 = vmax.f32 %v627, 0.0
        %v837 = vmax.f32 %v632, 0.0
        %v838 = vmax.f32 %v637, 0.0
        %v839 = vmax.f32 %v642, 0.0
        %v840 = vmax.f32 %v647, 0.0
        %v841 = vmax.f32 %v652, 0.0
        %v842 = vmax.f32 %v657, 0.0
        %v843 = vmax.f32 %v662, 0.0
        %v844 = vmax.f32 %v667, 0.0
        %v845 = vmax.f32 %v672, 0.0
        %v846 = vmax.f32 %v677, 0.0
        %v847 = vmax.f32 %v682, 0.0
        %v848 = vmax.f32 %v687, 0.0
        %v849 = vmax.f32 %v692, 0.0
        %v850 = vmax.f32 %v697, 0.0
        %v851 = vmax.f32 %v702, 0.0
        %v852 = vmax.f32 %v707, 0.0
        %v853 = vmax.f32 %v712, 0.0
        %v854 = vmax.f32 %v717, 0.0
        %v855 = vmax.f32 %v722, 0.0
        %v856 = vmax.f32 %v727, 0.0
        %v857 = vmax.f32 %v732, 0.0
        %v858 = vmax.f32 %v737, 0.0
        %v859 = vmax.f32 %v742, 0.0
        %v860 = vmax.f32 %v747, 0.0
        %v861 = vmax.f32 %v752, 0.0
        %v862 = vmax.f32 %v757, 0.0
        %v863 = vmax.f32 %v762, 0.0
        %v864 = vmax.f32 %v767, 0.0
        %v865 = vmax.f32 %v772, 0.0
        %v866 = vmax.f32 %v777, 0.0
        %v867 = vmax.f32 %v782, 0.0
        %v868 = vmax.f32 %v787, 0.0
        %v869 = vmax.f32 %v792, 0.0
        %v870 = vmax.f32 %v797, 0.0
        %v871 = vmax.f32 %v802, 0.0
        %v872 = vmax.f32 %v807, 0.0
        %874 = vrot.lane.b32.xlu0 %v230, 120
        %v875 = vpop.permute.xlu0 %874
        %878 = vrot.lane.b32.xlu0 %v235, 120
        %v879 = vpop.permute.xlu0 %878
        %vm881 = vcmask 64512
        %v883 = vsel %vm881, %v810, 0
        %v886 = vsel %vm881, %v811, 0
        %v889 = vsel %vm881, %v812, 0
        %v892 = vsel %vm881, %v813, 0
        %v895 = vsel %vm881, %v814, 0
        %v898 = vsel %vm881, %v815, 0
        %v901 = vsel %vm881, %v816, 0
        %v904 = vsel %vm881, %v817, 0
        %v907 = vsel %vm881, %v818, 0
        %v910 = vsel %vm881, %v819, 0
        %v913 = vsel %vm881, %v820, 0
        %v916 = vsel %vm881, %v821, 0
        %v919 = vsel %vm881, %v822, 0
        %v922 = vsel %vm881, %v823, 0
        %v925 = vsel %vm881, %v824, 0
        %v928 = vsel %vm881, %v825, 0
        %v931 = vsel %vm881, %v826, 0
        %v934 = vsel %vm881, %v827, 0
        %v937 = vsel %vm881, %v828, 0
        %v940 = vsel %vm881, %v829, 0
        %v943 = vsel %vm881, %v830, 0
        %v946 = vsel %vm881, %v831, 0
        %v949 = vsel %vm881, %v832, 0
        %v952 = vsel %vm881, %v833, 0
        %v955 = vsel %vm881, %v834, 0
        %v958 = vsel %vm881, %v835, 0
        %v961 = vsel %vm881, %v836, 0
        %v964 = vsel %vm881, %v837, 0
        %v967 = vsel %vm881, %v838, 0
        %v970 = vsel %vm881, %v839, 0
        %v973 = vsel %vm881, %v840, 0
        %v976 = vsel %vm881, %v841, 0
        %v979 = vsel %vm881, %v842, 0
        %v982 = vsel %vm881, %v843, 0
        %v985 = vsel %vm881, %v844, 0
        %v988 = vsel %vm881, %v845, 0
        %v991 = vsel %vm881, %v846, 0
        %v994 = vsel %vm881, %v847, 0
        %v997 = vsel %vm881, %v848, 0
        %v1000 = vsel %vm881, %v849, 0
        %v1003 = vsel %vm881, %v850, 0
        %v1006 = vsel %vm881, %v851, 0
        %v1009 = vsel %vm881, %v852, 0
        %v1012 = vsel %vm881, %v853, 0
        %v1015 = vsel %vm881, %v854, 0
        %v1018 = vsel %vm881, %v855, 0
        %v1021 = vsel %vm881, %v856, 0
        %v1024 = vsel %vm881, %v857, 0
        %v1027 = vsel %vm881, %v858, 0
        %v1030 = vsel %vm881, %v859, 0
        %v1033 = vsel %vm881, %v860, 0
        %v1036 = vsel %vm881, %v861, 0
        %v1039 = vsel %vm881, %v862, 0
        %v1042 = vsel %vm881, %v863, 0
        %v1045 = vsel %vm881, %v864, 0
        %v1048 = vsel %vm881, %v865, 0
        %v1051 = vsel %vm881, %v866, 0
        %v1054 = vsel %vm881, %v867, 0
        %v1057 = vsel %vm881, %v868, 0
        %v1060 = vsel %vm881, %v869, 0
        %v1063 = vsel %vm881, %v870, 0
        %v1066 = vsel %vm881, %v871, 0
        %v1069 = vsel %vm881, %v872, 0
        %1071 = vmatprep.subr.mxu0 0.0
        %1072 = vmatpush1.msra.mxu0 %v875
        %1073 = vmatprep.subr.mxu0 0.0
        %1074 = vmatpush1.msra.mxu0 0.0
        %1075 = vmatprep.subr.mxu0 0.0
        %1076 = vmatpush1.msra.mxu0 0.0
        %1077 = vmatprep.subr.mxu0 0.0
        %1078 = vmatpush1.msra.mxu0 0.0
        %1079 = vmatprep.subr.mxu0 0.0
        %1080 = vmatpush1.msra.mxu0 0.0
        %1081 = vmatprep.subr.mxu0 0.0
        %1082 = vmatpush1.msra.mxu0 0.0
        %1083 = vmatprep.subr.mxu0 0.0
        %1084 = vmatpush1.msra.mxu0 0.0
        %1085 = vmatprep.subr.mxu0 0.0
        %1086 = vmatpush1.msra.mxu0 0.0
        %1087 = vmatprep.subr.mxu0 0.0
        %1088 = vmatpush1.msra.mxu0 0.0
        %1089 = vmatprep.subr.mxu0 0.0
        %1090 = vmatpush1.msra.mxu0 0.0
        %1091 = vmatprep.subr.mxu0 0.0
        %1092 = vmatpush1.msra.mxu0 0.0
        %1093 = vmatprep.subr.mxu0 0.0
        %1094 = vmatpush1.msra.mxu0 0.0
        %1095 = vmatprep.subr.mxu0 0.0
        %1096 = vmatpush1.msra.mxu0 0.0
        %1097 = vmatprep.subr.mxu0 0.0
        %1098 = vmatpush1.msra.mxu0 0.0
        %1099 = vmatprep.subr.mxu0 0.0
        %1100 = vmatpush1.msra.mxu0 0.0
        %1101 = vmatprep.subr.mxu0 0.0
        %1102 = vmatpush1.msra.mxu0 0.0
        %1103 = vmatprep.subr.mxu0 0.0
        %1104 = vmatpush1.msra.mxu0 0.0
        %1105 = vmatprep.subr.mxu0 0.0
        %1106 = vmatpush1.msra.mxu0 0.0
        %1107 = vmatprep.subr.mxu0 0.0
        %1108 = vmatpush1.msra.mxu0 0.0
        %1109 = vmatprep.subr.mxu0 0.0
        %1110 = vmatpush1.msra.mxu0 0.0
        %1111 = vmatprep.subr.mxu0 0.0
        %1112 = vmatpush1.msra.mxu0 0.0
        %1113 = vmatprep.subr.mxu0 0.0
        %1114 = vmatpush1.msra.mxu0 0.0
        %1115 = vmatprep.subr.mxu0 0.0
        %1116 = vmatpush1.msra.mxu0 0.0
        %1117 = vmatprep.subr.mxu0 0.0
        %1118 = vmatpush1.msra.mxu0 0.0
        %1119 = vmatprep.subr.mxu0 0.0
        %1120 = vmatpush1.msra.mxu0 0.0
        %1121 = vmatprep.subr.mxu0 0.0
        %1122 = vmatpush1.msra.mxu0 0.0
        %1123 = vmatprep.subr.mxu0 0.0
        %1124 = vmatpush1.msra.mxu0 0.0
        %1125 = vmatprep.subr.mxu0 0.0
        %1126 = vmatpush1.msra.mxu0 0.0
        %1127 = vmatprep.subr.mxu0 0.0
        %1128 = vmatpush1.msra.mxu0 0.0
        %1129 = vmatprep.subr.mxu0 0.0
        %1130 = vmatpush1.msra.mxu0 0.0
        %1131 = vmatprep.subr.mxu0 0.0
        %1132 = vmatpush1.msra.mxu0 0.0
        %1133 = vmatprep.subr.mxu0 0.0
        %1134 = vmatpush1.msra.mxu0 0.0
        %1135 = vmatprep.mubr.f32.mxu0 0.0
        %1136 = vmatmul.mubr.f32.gmra.mrb[0].mxu0 %v883
        %v1137 = vpop.f32.mrb[0].mxu0
        %v1138 = vadd.f32 %v879, %v1137
        %v1139 = vpop.f32.mrb[0].mxu0
        %1140 = vmatprep.mubr.f32.mxu0 0.0
        %1141 = vmatmul.mubr.f32.gmra.mrb[0].mxu0 %v886
        %v1142 = vpop.f32.mrb[0].mxu0
        %v1143 = vadd.f32 %v879, %v1142
        %v1144 = vpop.f32.mrb[0].mxu0
        %1145 = vmatprep.mubr.f32.mxu0 0.0
        %1146 = vmatmul.mubr.f32.gmra.mrb[0].mxu0 %v889
        %v1147 = vpop.f32.mrb[0].mxu0
        %v1148 = vadd.f32 %v879, %v1147
        %v1149 = vpop.f32.mrb[0].mxu0
        %1150 = vmatprep.mubr.f32.mxu0 0.0
        %1151 = vmatmul.mubr.f32.gmra.mrb[0].mxu0 %v892
        %v1152 = vpop.f32.mrb[0].mxu0
        %v1153 = vadd.f32 %v879, %v1152
        %v1154 = vpop.f32.mrb[0].mxu0
        %1155 = vmatprep.mubr.f32.mxu0 0.0
        %1156 = vmatmul.mubr.f32.gmra.mrb[0].mxu0 %v895
        %v1157 = vpop.f32.mrb[0].mxu0
        %v1158 = vadd.f32 %v879, %v1157
        %v1159 = vpop.f32.mrb[0].mxu0
        %1160 = vmatprep.mubr.f32.mxu0 0.0
        %1161 = vmatmul.mubr.f32.gmra.mrb[0].mxu0 %v898
        %v1162 = vpop.f32.mrb[0].mxu0
        %v1163 = vadd.f32 %v879, %v1162
        %v1164 = vpop.f32.mrb[0].mxu0
        %1165 = vmatprep.mubr.f32.mxu0 0.0
        %1166 = vmatmul.mubr.f32.gmra.mrb[0].mxu0 %v901
        %v1167 = vpop.f32.mrb[0].mxu0
        %v1168 = vadd.f32 %v879, %v1167
        %v1169 = vpop.f32.mrb[0].mxu0
        %1170 = vmatprep.mubr.f32.mxu0 0.0
        %1171 = vmatmul.mubr.f32.gmra.mrb[0].mxu0 %v904
        %v1172 = vpop.f32.mrb[0].mxu0
        %v1173 = vadd.f32 %v879, %v1172
        %v1174 = vpop.f32.mrb[0].mxu0
        %1175 = vmatprep.mubr.f32.mxu0 0.0
        %1176 = vmatmul.mubr.f32.gmra.mrb[0].mxu0 %v907
        %v1177 = vpop.f32.mrb[0].mxu0
        %v1178 = vadd.f32 %v879, %v1177
        %v1179 = vpop.f32.mrb[0].mxu0
        %1180 = vmatprep.mubr.f32.mxu0 0.0
        %1181 = vmatmul.mubr.f32.gmra.mrb[0].mxu0 %v910
        %v1182 = vpop.f32.mrb[0].mxu0
        %v1183 = vadd.f32 %v879, %v1182
        %v1184 = vpop.f32.mrb[0].mxu0
        %1185 = vmatprep.mubr.f32.mxu0 0.0
        %1186 = vmatmul.mubr.f32.gmra.mrb[0].mxu0 %v913
        %v1187 = vpop.f32.mrb[0].mxu0
        %v1188 = vadd.f32 %v879, %v1187
        %v1189 = vpop.f32.mrb[0].mxu0
        %1190 = vmatprep.mubr.f32.mxu0 0.0
        %1191 = vmatmul.mubr.f32.gmra.mrb[0].mxu0 %v916
        %v1192 = vpop.f32.mrb[0].mxu0
        %v1193 = vadd.f32 %v879, %v1192
        %v1194 = vpop.f32.mrb[0].mxu0
        %1195 = vmatprep.mubr.f32.mxu0 0.0
        %1196 = vmatmul.mubr.f32.gmra.mrb[0].mxu0 %v919
        %v1197 = vpop.f32.mrb[0].mxu0
        %v1198 = vadd.f32 %v879, %v1197
        %v1199 = vpop.f32.mrb[0].mxu0
        %1200 = vmatprep.mubr.f32.mxu0 0.0
        %1201 = vmatmul.mubr.f32.gmra.mrb[0].mxu0 %v922
        %v1202 = vpop.f32.mrb[0].mxu0
        %v1203 = vadd.f32 %v879, %v1202
        %v1204 = vpop.f32.mrb[0].mxu0
        %1205 = vmatprep.mubr.f32.mxu0 0.0
        %1206 = vmatmul.mubr.f32.gmra.mrb[0].mxu0 %v925
        %v1207 = vpop.f32.mrb[0].mxu0
        %v1208 = vadd.f32 %v879, %v1207
        %v1209 = vpop.f32.mrb[0].mxu0
        %1210 = vmatprep.mubr.f32.mxu0 0.0
        %1211 = vmatmul.mubr.f32.gmra.mrb[0].mxu0 %v928
        %v1212 = vpop.f32.mrb[0].mxu0
        %v1213 = vadd.f32 %v879, %v1212
        %v1214 = vpop.f32.mrb[0].mxu0
        %1215 = vmatprep.mubr.f32.mxu0 0.0
        %1216 = vmatmul.mubr.f32.gmra.mrb[0].mxu0 %v931
        %v1217 = vpop.f32.mrb[0].mxu0
        %v1218 = vadd.f32 %v879, %v1217
        %v1219 = vpop.f32.mrb[0].mxu0
        %1220 = vmatprep.mubr.f32.mxu0 0.0
        %1221 = vmatmul.mubr.f32.gmra.mrb[0].mxu0 %v934
        %v1222 = vpop.f32.mrb[0].mxu0
        %v1223 = vadd.f32 %v879, %v1222
        %v1224 = vpop.f32.mrb[0].mxu0
        %1225 = vmatprep.mubr.f32.mxu0 0.0
        %1226 = vmatmul.mubr.f32.gmra.mrb[0].mxu0 %v937
        %v1227 = vpop.f32.mrb[0].mxu0
        %v1228 = vadd.f32 %v879, %v1227
        %v1229 = vpop.f32.mrb[0].mxu0
        %1230 = vmatprep.mubr.f32.mxu0 0.0
        %1231 = vmatmul.mubr.f32.gmra.mrb[0].mxu0 %v940
        %v1232 = vpop.f32.mrb[0].mxu0
        %v1233 = vadd.f32 %v879, %v1232
        %v1234 = vpop.f32.mrb[0].mxu0
        %1235 = vmatprep.mubr.f32.mxu0 0.0
        %1236 = vmatmul.mubr.f32.gmra.mrb[0].mxu0 %v943
        %v1237 = vpop.f32.mrb[0].mxu0
        %v1238 = vadd.f32 %v879, %v1237
        %v1239 = vpop.f32.mrb[0].mxu0
        %1240 = vmatprep.mubr.f32.mxu0 0.0
        %1241 = vmatmul.mubr.f32.gmra.mrb[0].mxu0 %v946
        %v1242 = vpop.f32.mrb[0].mxu0
        %v1243 = vadd.f32 %v879, %v1242
        %v1244 = vpop.f32.mrb[0].mxu0
        %1245 = vmatprep.mubr.f32.mxu0 0.0
        %1246 = vmatmul.mubr.f32.gmra.mrb[0].mxu0 %v949
        %v1247 = vpop.f32.mrb[0].mxu0
        %v1248 = vadd.f32 %v879, %v1247
        %v1249 = vpop.f32.mrb[0].mxu0
        %1250 = vmatprep.mubr.f32.mxu0 0.0
        %1251 = vmatmul.mubr.f32.gmra.mrb[0].mxu0 %v952
        %v1252 = vpop.f32.mrb[0].mxu0
        %v1253 = vadd.f32 %v879, %v1252
        %v1254 = vpop.f32.mrb[0].mxu0
        %1255 = vmatprep.mubr.f32.mxu0 0.0
        %1256 = vmatmul.mubr.f32.gmra.mrb[0].mxu0 %v955
        %v1257 = vpop.f32.mrb[0].mxu0
        %v1258 = vadd.f32 %v879, %v1257
        %v1259 = vpop.f32.mrb[0].mxu0
        %1260 = vmatprep.mubr.f32.mxu0 0.0
        %1261 = vmatmul.mubr.f32.gmra.mrb[0].mxu0 %v958
        %v1262 = vpop.f32.mrb[0].mxu0
        %v1263 = vadd.f32 %v879, %v1262
        %v1264 = vpop.f32.mrb[0].mxu0
        %1265 = vmatprep.mubr.f32.mxu0 0.0
        %1266 = vmatmul.mubr.f32.gmra.mrb[0].mxu0 %v961
        %v1267 = vpop.f32.mrb[0].mxu0
        %v1268 = vadd.f32 %v879, %v1267
        %v1269 = vpop.f32.mrb[0].mxu0
        %1270 = vmatprep.mubr.f32.mxu0 0.0
        %1271 = vmatmul.mubr.f32.gmra.mrb[0].mxu0 %v964
        %v1272 = vpop.f32.mrb[0].mxu0
        %v1273 = vadd.f32 %v879, %v1272
        %v1274 = vpop.f32.mrb[0].mxu0
        %1275 = vmatprep.mubr.f32.mxu0 0.0
        %1276 = vmatmul.mubr.f32.gmra.mrb[0].mxu0 %v967
        %v1277 = vpop.f32.mrb[0].mxu0
        %v1278 = vadd.f32 %v879, %v1277
        %v1279 = vpop.f32.mrb[0].mxu0
        %1280 = vmatprep.mubr.f32.mxu0 0.0
        %1281 = vmatmul.mubr.f32.gmra.mrb[0].mxu0 %v970
        %v1282 = vpop.f32.mrb[0].mxu0
        %v1283 = vadd.f32 %v879, %v1282
        %v1284 = vpop.f32.mrb[0].mxu0
        %1285 = vmatprep.mubr.f32.mxu0 0.0
        %1286 = vmatmul.mubr.f32.gmra.mrb[0].mxu0 %v973
        %v1287 = vpop.f32.mrb[0].mxu0
        %v1288 = vadd.f32 %v879, %v1287
        %v1289 = vpop.f32.mrb[0].mxu0
        %1290 = vmatprep.mubr.f32.mxu0 0.0
        %1291 = vmatmul.mubr.f32.gmra.mrb[0].mxu0 %v976
        %v1292 = vpop.f32.mrb[0].mxu0
        %v1293 = vadd.f32 %v879, %v1292
        %v1294 = vpop.f32.mrb[0].mxu0
        %1295 = vmatprep.mubr.f32.mxu0 0.0
        %1296 = vmatmul.mubr.f32.gmra.mrb[0].mxu0 %v979
        %v1297 = vpop.f32.mrb[0].mxu0
        %v1298 = vadd.f32 %v879, %v1297
        %v1299 = vpop.f32.mrb[0].mxu0
        %1300 = vmatprep.mubr.f32.mxu0 0.0
        %1301 = vmatmul.mubr.f32.gmra.mrb[0].mxu0 %v982
        %v1302 = vpop.f32.mrb[0].mxu0
        %v1303 = vadd.f32 %v879, %v1302
        %v1304 = vpop.f32.mrb[0].mxu0
        %1305 = vmatprep.mubr.f32.mxu0 0.0
        %1306 = vmatmul.mubr.f32.gmra.mrb[0].mxu0 %v985
        %v1307 = vpop.f32.mrb[0].mxu0
        %v1308 = vadd.f32 %v879, %v1307
        %v1309 = vpop.f32.mrb[0].mxu0
        %1310 = vmatprep.mubr.f32.mxu0 0.0
        %1311 = vmatmul.mubr.f32.gmra.mrb[0].mxu0 %v988
        %v1312 = vpop.f32.mrb[0].mxu0
        %v1313 = vadd.f32 %v879, %v1312
        %v1314 = vpop.f32.mrb[0].mxu0
        %1315 = vmatprep.mubr.f32.mxu0 0.0
        %1316 = vmatmul.mubr.f32.gmra.mrb[0].mxu0 %v991
        %v1317 = vpop.f32.mrb[0].mxu0
        %v1318 = vadd.f32 %v879, %v1317
        %v1319 = vpop.f32.mrb[0].mxu0
        %1320 = vmatprep.mubr.f32.mxu0 0.0
        %1321 = vmatmul.mubr.f32.gmra.mrb[0].mxu0 %v994
        %v1322 = vpop.f32.mrb[0].mxu0
        %v1323 = vadd.f32 %v879, %v1322
        %v1324 = vpop.f32.mrb[0].mxu0
        %1325 = vmatprep.mubr.f32.mxu0 0.0
        %1326 = vmatmul.mubr.f32.gmra.mrb[0].mxu0 %v997
        %v1327 = vpop.f32.mrb[0].mxu0
        %v1328 = vadd.f32 %v879, %v1327
        %v1329 = vpop.f32.mrb[0].mxu0
        %1330 = vmatprep.mubr.f32.mxu0 0.0
        %1331 = vmatmul.mubr.f32.gmra.mrb[0].mxu0 %v1000
        %v1332 = vpop.f32.mrb[0].mxu0
        %v1333 = vadd.f32 %v879, %v1332
        %v1334 = vpop.f32.mrb[0].mxu0
        %1335 = vmatprep.mubr.f32.mxu0 0.0
        %1336 = vmatmul.mubr.f32.gmra.mrb[0].mxu0 %v1003
        %v1337 = vpop.f32.mrb[0].mxu0
        %v1338 = vadd.f32 %v879, %v1337
        %v1339 = vpop.f32.mrb[0].mxu0
        %1340 = vmatprep.mubr.f32.mxu0 0.0
        %1341 = vmatmul.mubr.f32.gmra.mrb[0].mxu0 %v1006
        %v1342 = vpop.f32.mrb[0].mxu0
        %v1343 = vadd.f32 %v879, %v1342
        %v1344 = vpop.f32.mrb[0].mxu0
        %1345 = vmatprep.mubr.f32.mxu0 0.0
        %1346 = vmatmul.mubr.f32.gmra.mrb[0].mxu0 %v1009
        %v1347 = vpop.f32.mrb[0].mxu0
        %v1348 = vadd.f32 %v879, %v1347
        %v1349 = vpop.f32.mrb[0].mxu0
        %1350 = vmatprep.mubr.f32.mxu0 0.0
        %1351 = vmatmul.mubr.f32.gmra.mrb[0].mxu0 %v1012
        %v1352 = vpop.f32.mrb[0].mxu0
        %v1353 = vadd.f32 %v879, %v1352
        %v1354 = vpop.f32.mrb[0].mxu0
        %1355 = vmatprep.mubr.f32.mxu0 0.0
        %1356 = vmatmul.mubr.f32.gmra.mrb[0].mxu0 %v1015
        %v1357 = vpop.f32.mrb[0].mxu0
        %v1358 = vadd.f32 %v879, %v1357
        %v1359 = vpop.f32.mrb[0].mxu0
        %1360 = vmatprep.mubr.f32.mxu0 0.0
        %1361 = vmatmul.mubr.f32.gmra.mrb[0].mxu0 %v1018
        %v1362 = vpop.f32.mrb[0].mxu0
        %v1363 = vadd.f32 %v879, %v1362
        %v1364 = vpop.f32.mrb[0].mxu0
        %1365 = vmatprep.mubr.f32.mxu0 0.0
        %1366 = vmatmul.mubr.f32.gmra.mrb[0].mxu0 %v1021
        %v1367 = vpop.f32.mrb[0].mxu0
        %v1368 = vadd.f32 %v879, %v1367
        %v1369 = vpop.f32.mrb[0].mxu0
        %1370 = vmatprep.mubr.f32.mxu0 0.0
        %1371 = vmatmul.mubr.f32.gmra.mrb[0].mxu0 %v1024
        %v1372 = vpop.f32.mrb[0].mxu0
        %v1373 = vadd.f32 %v879, %v1372
        %v1374 = vpop.f32.mrb[0].mxu0
        %1375 = vmatprep.mubr.f32.mxu0 0.0
        %1376 = vmatmul.mubr.f32.gmra.mrb[0].mxu0 %v1027
        %v1377 = vpop.f32.mrb[0].mxu0
        %v1378 = vadd.f32 %v879, %v1377
        %v1379 = vpop.f32.mrb[0].mxu0
        %1380 = vmatprep.mubr.f32.mxu0 0.0
        %1381 = vmatmul.mubr.f32.gmra.mrb[0].mxu0 %v1030
        %v1382 = vpop.f32.mrb[0].mxu0
        %v1383 = vadd.f32 %v879, %v1382
        %v1384 = vpop.f32.mrb[0].mxu0
        %1385 = vmatprep.mubr.f32.mxu0 0.0
        %1386 = vmatmul.mubr.f32.gmra.mrb[0].mxu0 %v1033
        %v1387 = vpop.f32.mrb[0].mxu0
        %v1388 = vadd.f32 %v879, %v1387
        %v1389 = vpop.f32.mrb[0].mxu0
        %1390 = vmatprep.mubr.f32.mxu0 0.0
        %1391 = vmatmul.mubr.f32.gmra.mrb[0].mxu0 %v1036
        %v1392 = vpop.f32.mrb[0].mxu0
        %v1393 = vadd.f32 %v879, %v1392
        %v1394 = vpop.f32.mrb[0].mxu0
        %1395 = vmatprep.mubr.f32.mxu0 0.0
        %1396 = vmatmul.mubr.f32.gmra.mrb[0].mxu0 %v1039
        %v1397 = vpop.f32.mrb[0].mxu0
        %v1398 = vadd.f32 %v879, %v1397
        %v1399 = vpop.f32.mrb[0].mxu0
        %1400 = vmatprep.mubr.f32.mxu0 0.0
        %1401 = vmatmul.mubr.f32.gmra.mrb[0].mxu0 %v1042
        %v1402 = vpop.f32.mrb[0].mxu0
        %v1403 = vadd.f32 %v879, %v1402
        %v1404 = vpop.f32.mrb[0].mxu0
        %1405 = vmatprep.mubr.f32.mxu0 0.0
        %1406 = vmatmul.mubr.f32.gmra.mrb[0].mxu0 %v1045
        %v1407 = vpop.f32.mrb[0].mxu0
        %v1408 = vadd.f32 %v879, %v1407
        %v1409 = vpop.f32.mrb[0].mxu0
        %1410 = vmatprep.mubr.f32.mxu0 0.0
        %1411 = vmatmul.mubr.f32.gmra.mrb[0].mxu0 %v1048
        %v1412 = vpop.f32.mrb[0].mxu0
        %v1413 = vadd.f32 %v879, %v1412
        %v1414 = vpop.f32.mrb[0].mxu0
        %1415 = vmatprep.mubr.f32.mxu0 0.0
        %1416 = vmatmul.mubr.f32.gmra.mrb[0].mxu0 %v1051
        %v1417 = vpop.f32.mrb[0].mxu0
        %v1418 = vadd.f32 %v879, %v1417
        %v1419 = vpop.f32.mrb[0].mxu0
        %1420 = vmatprep.mubr.f32.mxu0 0.0
        %1421 = vmatmul.mubr.f32.gmra.mrb[0].mxu0 %v1054
        %v1422 = vpop.f32.mrb[0].mxu0
        %v1423 = vadd.f32 %v879, %v1422
        %v1424 = vpop.f32.mrb[0].mxu0
        %1425 = vmatprep.mubr.f32.mxu0 0.0
        %1426 = vmatmul.mubr.f32.gmra.mrb[0].mxu0 %v1057
        %v1427 = vpop.f32.mrb[0].mxu0
        %v1428 = vadd.f32 %v879, %v1427
        %v1429 = vpop.f32.mrb[0].mxu0
        %1430 = vmatprep.mubr.f32.mxu0 0.0
        %1431 = vmatmul.mubr.f32.gmra.mrb[0].mxu0 %v1060
        %v1432 = vpop.f32.mrb[0].mxu0
        %v1433 = vadd.f32 %v879, %v1432
        %v1434 = vpop.f32.mrb[0].mxu0
        %1435 = vmatprep.mubr.f32.mxu0 0.0
        %1436 = vmatmul.mubr.f32.gmra.mrb[0].mxu0 %v1063
        %v1437 = vpop.f32.mrb[0].mxu0
        %v1438 = vadd.f32 %v879, %v1437
        %v1439 = vpop.f32.mrb[0].mxu0
        %1440 = vmatprep.mubr.f32.mxu0 0.0
        %1441 = vmatmul.mubr.f32.gmra.mrb[0].mxu0 %v1066
        %v1442 = vpop.f32.mrb[0].mxu0
        %v1443 = vadd.f32 %v879, %v1442
        %v1444 = vpop.f32.mrb[0].mxu0
        %1445 = vmatprep.mubr.f32.mxu0 0.0
        %1446 = vmatmul.mubr.f32.gmra.mrb[0].mxu0 %v1069
        %v1447 = vpop.f32.mrb[0].mxu0
        %v1448 = vadd.f32 %v879, %v1447
        %v1449 = vpop.f32.mrb[0].mxu0
        %1450 = vdwg.mxu0
        %v1451 = vmax.f32 %v1138, 0.0
        %v1452 = vmax.f32 %v1143, 0.0
        %v1453 = vmax.f32 %v1148, 0.0
        %v1454 = vmax.f32 %v1153, 0.0
        %v1455 = vmax.f32 %v1158, 0.0
        %v1456 = vmax.f32 %v1163, 0.0
        %v1457 = vmax.f32 %v1168, 0.0
        %v1458 = vmax.f32 %v1173, 0.0
        %v1459 = vmax.f32 %v1178, 0.0
        %v1460 = vmax.f32 %v1183, 0.0
        %v1461 = vmax.f32 %v1188, 0.0
        %v1462 = vmax.f32 %v1193, 0.0
        %v1463 = vmax.f32 %v1198, 0.0
        %v1464 = vmax.f32 %v1203, 0.0
        %v1465 = vmax.f32 %v1208, 0.0
        %v1466 = vmax.f32 %v1213, 0.0
        %v1467 = vmax.f32 %v1218, 0.0
        %v1468 = vmax.f32 %v1223, 0.0
        %v1469 = vmax.f32 %v1228, 0.0
        %v1470 = vmax.f32 %v1233, 0.0
        %v1471 = vmax.f32 %v1238, 0.0
        %v1472 = vmax.f32 %v1243, 0.0
        %v1473 = vmax.f32 %v1248, 0.0
        %v1474 = vmax.f32 %v1253, 0.0
        %v1475 = vmax.f32 %v1258, 0.0
        %v1476 = vmax.f32 %v1263, 0.0
        %v1477 = vmax.f32 %v1268, 0.0
        %v1478 = vmax.f32 %v1273, 0.0
        %v1479 = vmax.f32 %v1278, 0.0
        %v1480 = vmax.f32 %v1283, 0.0
        %v1481 = vmax.f32 %v1288, 0.0
        %v1482 = vmax.f32 %v1293, 0.0
        %v1483 = vmax.f32 %v1298, 0.0
        %v1484 = vmax.f32 %v1303, 0.0
        %v1485 = vmax.f32 %v1308, 0.0
        %v1486 = vmax.f32 %v1313, 0.0
        %v1487 = vmax.f32 %v1318, 0.0
        %v1488 = vmax.f32 %v1323, 0.0
        %v1489 = vmax.f32 %v1328, 0.0
        %v1490 = vmax.f32 %v1333, 0.0
        %v1491 = vmax.f32 %v1338, 0.0
        %v1492 = vmax.f32 %v1343, 0.0
        %v1493 = vmax.f32 %v1348, 0.0
        %v1494 = vmax.f32 %v1353, 0.0
        %v1495 = vmax.f32 %v1358, 0.0
        %v1496 = vmax.f32 %v1363, 0.0
        %v1497 = vmax.f32 %v1368, 0.0
        %v1498 = vmax.f32 %v1373, 0.0
        %v1499 = vmax.f32 %v1378, 0.0
        %v1500 = vmax.f32 %v1383, 0.0
        %v1501 = vmax.f32 %v1388, 0.0
        %v1502 = vmax.f32 %v1393, 0.0
        %v1503 = vmax.f32 %v1398, 0.0
        %v1504 = vmax.f32 %v1403, 0.0
        %v1505 = vmax.f32 %v1408, 0.0
        %v1506 = vmax.f32 %v1413, 0.0
        %v1507 = vmax.f32 %v1418, 0.0
        %v1508 = vmax.f32 %v1423, 0.0
        %v1509 = vmax.f32 %v1428, 0.0
        %v1510 = vmax.f32 %v1433, 0.0
        %v1511 = vmax.f32 %v1438, 0.0
        %v1512 = vmax.f32 %v1443, 0.0
        %v1513 = vmax.f32 %v1448, 0.0
        %1515 = vrot.lane.b32.xlu0 %v230, 111
        %v1516 = vpop.permute.xlu0 %1515
        %1517 = vrot.lane.b32.xlu0 %v231, 111
        %v1518 = vpop.permute.xlu0 %1517
        %1520 = vrot.lane.b32.xlu0 %v235, 111
        %v1521 = vpop.permute.xlu0 %1520
        %vm1523 = vcmask 72704
        %v1525 = vsel %vm1523, %v1451, 0
        %v1528 = vsel %vm1523, %v1452, 0
        %v1531 = vsel %vm1523, %v1453, 0
        %v1534 = vsel %vm1523, %v1454, 0
        %v1537 = vsel %vm1523, %v1455, 0
        %v1540 = vsel %vm1523, %v1456, 0
        %v1543 = vsel %vm1523, %v1457, 0
        %v1546 = vsel %vm1523, %v1458, 0
        %v1549 = vsel %vm1523, %v1459, 0
        %v1552 = vsel %vm1523, %v1460, 0
        %v1555 = vsel %vm1523, %v1461, 0
        %v1558 = vsel %vm1523, %v1462, 0
        %v1561 = vsel %vm1523, %v1463, 0
        %v1564 = vsel %vm1523, %v1464, 0
        %v1567 = vsel %vm1523, %v1465, 0
        %v1570 = vsel %vm1523, %v1466, 0
        %v1573 = vsel %vm1523, %v1467, 0
        %v1576 = vsel %vm1523, %v1468, 0
        %v1579 = vsel %vm1523, %v1469, 0
        %v1582 = vsel %vm1523, %v1470, 0
        %v1585 = vsel %vm1523, %v1471, 0
        %v1588 = vsel %vm1523, %v1472, 0
        %v1591 = vsel %vm1523, %v1473, 0
        %v1594 = vsel %vm1523, %v1474, 0
        %v1597 = vsel %vm1523, %v1475, 0
        %v1600 = vsel %vm1523, %v1476, 0
        %v1603 = vsel %vm1523, %v1477, 0
        %v1606 = vsel %vm1523, %v1478, 0
        %v1609 = vsel %vm1523, %v1479, 0
        %v1612 = vsel %vm1523, %v1480, 0
        %v1615 = vsel %vm1523, %v1481, 0
        %v1618 = vsel %vm1523, %v1482, 0
        %v1621 = vsel %vm1523, %v1483, 0
        %v1624 = vsel %vm1523, %v1484, 0
        %v1627 = vsel %vm1523, %v1485, 0
        %v1630 = vsel %vm1523, %v1486, 0
        %v1633 = vsel %vm1523, %v1487, 0
        %v1636 = vsel %vm1523, %v1488, 0
        %v1639 = vsel %vm1523, %v1489, 0
        %v1642 = vsel %vm1523, %v1490, 0
        %v1645 = vsel %vm1523, %v1491, 0
        %v1648 = vsel %vm1523, %v1492, 0
        %v1651 = vsel %vm1523, %v1493, 0
        %v1654 = vsel %vm1523, %v1494, 0
        %v1657 = vsel %vm1523, %v1495, 0
        %v1660 = vsel %vm1523, %v1496, 0
        %v1663 = vsel %vm1523, %v1497, 0
        %v1666 = vsel %vm1523, %v1498, 0
        %v1669 = vsel %vm1523, %v1499, 0
        %v1672 = vsel %vm1523, %v1500, 0
        %v1675 = vsel %vm1523, %v1501, 0
        %v1678 = vsel %vm1523, %v1502, 0
        %v1681 = vsel %vm1523, %v1503, 0
        %v1684 = vsel %vm1523, %v1504, 0
        %v1687 = vsel %vm1523, %v1505, 0
        %v1690 = vsel %vm1523, %v1506, 0
        %v1693 = vsel %vm1523, %v1507, 0
        %v1696 = vsel %vm1523, %v1508, 0
        %v1699 = vsel %vm1523, %v1509, 0
        %v1702 = vsel %vm1523, %v1510, 0
        %v1705 = vsel %vm1523, %v1511, 0
        %v1708 = vsel %vm1523, %v1512, 0
        %v1711 = vsel %vm1523, %v1513, 0
        %vm1713 = vcmask 1040384
        %v1714 = vsel %vm1713, %v1518, 0
        %1716 = vmatprep.subr.mxu0 0.0
        %1717 = vmatpush1.msra.mxu0 %v1516
        %1718 = vmatprep.subr.mxu0 0.0
        %1719 = vmatpush1.msra.mxu0 %v1714
        %1720 = vmatprep.subr.mxu0 0.0
        %1721 = vmatpush1.msra.mxu0 0.0
        %1722 = vmatprep.subr.mxu0 0.0
        %1723 = vmatpush1.msra.mxu0 0.0
        %1724 = vmatprep.subr.mxu0 0.0
        %1725 = vmatpush1.msra.mxu0 0.0
        %1726 = vmatprep.subr.mxu0 0.0
        %1727 = vmatpush1.msra.mxu0 0.0
        %1728 = vmatprep.subr.mxu0 0.0
        %1729 = vmatpush1.msra.mxu0 0.0
        %1730 = vmatprep.subr.mxu0 0.0
        %1731 = vmatpush1.msra.mxu0 0.0
        %1732 = vmatprep.subr.mxu0 0.0
        %1733 = vmatpush1.msra.mxu0 0.0
        %1734 = vmatprep.subr.mxu0 0.0
        %1735 = vmatpush1.msra.mxu0 0.0
        %1736 = vmatprep.subr.mxu0 0.0
        %1737 = vmatpush1.msra.mxu0 0.0
        %1738 = vmatprep.subr.mxu0 0.0
        %1739 = vmatpush1.msra.mxu0 0.0
        %1740 = vmatprep.subr.mxu0 0.0
        %1741 = vmatpush1.msra.mxu0 0.0
        %1742 = vmatprep.subr.mxu0 0.0
        %1743 = vmatpush1.msra.mxu0 0.0
        %1744 = vmatprep.subr.mxu0 0.0
        %1745 = vmatpush1.msra.mxu0 0.0
        %1746 = vmatprep.subr.mxu0 0.0
        %1747 = vmatpush1.msra.mxu0 0.0
        %1748 = vmatprep.subr.mxu0 0.0
        %1749 = vmatpush1.msra.mxu0 0.0
        %1750 = vmatprep.subr.mxu0 0.0
        %1751 = vmatpush1.msra.mxu0 0.0
        %1752 = vmatprep.subr.mxu0 0.0
        %1753 = vmatpush1.msra.mxu0 0.0
        %1754 = vmatprep.subr.mxu0 0.0
        %1755 = vmatpush1.msra.mxu0 0.0
        %1756 = vmatprep.subr.mxu0 0.0
        %1757 = vmatpush1.msra.mxu0 0.0
        %1758 = vmatprep.subr.mxu0 0.0
        %1759 = vmatpush1.msra.mxu0 0.0
        %1760 = vmatprep.subr.mxu0 0.0
        %1761 = vmatpush1.msra.mxu0 0.0
        %1762 = vmatprep.subr.mxu0 0.0
        %1763 = vmatpush1.msra.mxu0 0.0
        %1764 = vmatprep.subr.mxu0 0.0
        %1765 = vmatpush1.msra.mxu0 0.0
        %1766 = vmatprep.subr.mxu0 0.0
        %1767 = vmatpush1.msra.mxu0 0.0
        %1768 = vmatprep.subr.mxu0 0.0
        %1769 = vmatpush1.msra.mxu0 0.0
        %1770 = vmatprep.subr.mxu0 0.0
        %1771 = vmatpush1.msra.mxu0 0.0
        %1772 = vmatprep.subr.mxu0 0.0
        %1773 = vmatpush1.msra.mxu0 0.0
        %1774 = vmatprep.subr.mxu0 0.0
        %1775 = vmatpush1.msra.mxu0 0.0
        %1776 = vmatprep.subr.mxu0 0.0
        %1777 = vmatpush1.msra.mxu0 0.0
        %1778 = vmatprep.subr.mxu0 0.0
        %1779 = vmatpush1.msra.mxu0 0.0
        %1780 = vmatprep.mubr.f32.mxu0 0.0
        %1781 = vmatmul.mubr.f32.gmra.mrb[0].mxu0 %v1525
        %v1782 = vpop.f32.mrb[0].mxu0
        %v1783 = vadd.f32 %v1521, %v1782
        %v1784 = vpop.f32.mrb[0].mxu0
        %1785 = vmatprep.mubr.f32.mxu0 0.0
        %1786 = vmatmul.mubr.f32.gmra.mrb[0].mxu0 %v1528
        %v1787 = vpop.f32.mrb[0].mxu0
        %v1788 = vadd.f32 %v1521, %v1787
        %v1789 = vpop.f32.mrb[0].mxu0
        %1790 = vmatprep.mubr.f32.mxu0 0.0
        %1791 = vmatmul.mubr.f32.gmra.mrb[0].mxu0 %v1531
        %v1792 = vpop.f32.mrb[0].mxu0
        %v1793 = vadd.f32 %v1521, %v1792
        %v1794 = vpop.f32.mrb[0].mxu0
        %1795 = vmatprep.mubr.f32.mxu0 0.0
        %1796 = vmatmul.mubr.f32.gmra.mrb[0].mxu0 %v1534
        %v1797 = vpop.f32.mrb[0].mxu0
        %v1798 = vadd.f32 %v1521, %v1797
        %v1799 = vpop.f32.mrb[0].mxu0
        %1800 = vmatprep.mubr.f32.mxu0 0.0
        %1801 = vmatmul.mubr.f32.gmra.mrb[0].mxu0 %v1537
        %v1802 = vpop.f32.mrb[0].mxu0
        %v1803 = vadd.f32 %v1521, %v1802
        %v1804 = vpop.f32.mrb[0].mxu0
        %1805 = vmatprep.mubr.f32.mxu0 0.0
        %1806 = vmatmul.mubr.f32.gmra.mrb[0].mxu0 %v1540
        %v1807 = vpop.f32.mrb[0].mxu0
        %v1808 = vadd.f32 %v1521, %v1807
        %v1809 = vpop.f32.mrb[0].mxu0
        %1810 = vmatprep.mubr.f32.mxu0 0.0
        %1811 = vmatmul.mubr.f32.gmra.mrb[0].mxu0 %v1543
        %v1812 = vpop.f32.mrb[0].mxu0
        %v1813 = vadd.f32 %v1521, %v1812
        %v1814 = vpop.f32.mrb[0].mxu0
        %1815 = vmatprep.mubr.f32.mxu0 0.0
        %1816 = vmatmul.mubr.f32.gmra.mrb[0].mxu0 %v1546
        %v1817 = vpop.f32.mrb[0].mxu0
        %v1818 = vadd.f32 %v1521, %v1817
        %v1819 = vpop.f32.mrb[0].mxu0
        %1820 = vmatprep.mubr.f32.mxu0 0.0
        %1821 = vmatmul.mubr.f32.gmra.mrb[0].mxu0 %v1549
        %v1822 = vpop.f32.mrb[0].mxu0
        %v1823 = vadd.f32 %v1521, %v1822
        %v1824 = vpop.f32.mrb[0].mxu0
        %1825 = vmatprep.mubr.f32.mxu0 0.0
        %1826 = vmatmul.mubr.f32.gmra.mrb[0].mxu0 %v1552
        %v1827 = vpop.f32.mrb[0].mxu0
        %v1828 = vadd.f32 %v1521, %v1827
        %v1829 = vpop.f32.mrb[0].mxu0
        %1830 = vmatprep.mubr.f32.mxu0 0.0
        %1831 = vmatmul.mubr.f32.gmra.mrb[0].mxu0 %v1555
        %v1832 = vpop.f32.mrb[0].mxu0
        %v1833 = vadd.f32 %v1521, %v1832
        %v1834 = vpop.f32.mrb[0].mxu0
        %1835 = vmatprep.mubr.f32.mxu0 0.0
        %1836 = vmatmul.mubr.f32.gmra.mrb[0].mxu0 %v1558
        %v1837 = vpop.f32.mrb[0].mxu0
        %v1838 = vadd.f32 %v1521, %v1837
        %v1839 = vpop.f32.mrb[0].mxu0
        %1840 = vmatprep.mubr.f32.mxu0 0.0
        %1841 = vmatmul.mubr.f32.gmra.mrb[0].mxu0 %v1561
        %v1842 = vpop.f32.mrb[0].mxu0
        %v1843 = vadd.f32 %v1521, %v1842
        %v1844 = vpop.f32.mrb[0].mxu0
        %1845 = vmatprep.mubr.f32.mxu0 0.0
        %1846 = vmatmul.mubr.f32.gmra.mrb[0].mxu0 %v1564
        %v1847 = vpop.f32.mrb[0].mxu0
        %v1848 = vadd.f32 %v1521, %v1847
        %v1849 = vpop.f32.mrb[0].mxu0
        %1850 = vmatprep.mubr.f32.mxu0 0.0
        %1851 = vmatmul.mubr.f32.gmra.mrb[0].mxu0 %v1567
        %v1852 = vpop.f32.mrb[0].mxu0
        %v1853 = vadd.f32 %v1521, %v1852
        %v1854 = vpop.f32.mrb[0].mxu0
        %1855 = vmatprep.mubr.f32.mxu0 0.0
        %1856 = vmatmul.mubr.f32.gmra.mrb[0].mxu0 %v1570
        %v1857 = vpop.f32.mrb[0].mxu0
        %v1858 = vadd.f32 %v1521, %v1857
        %v1859 = vpop.f32.mrb[0].mxu0
        %1860 = vmatprep.mubr.f32.mxu0 0.0
        %1861 = vmatmul.mubr.f32.gmra.mrb[0].mxu0 %v1573
        %v1862 = vpop.f32.mrb[0].mxu0
        %v1863 = vadd.f32 %v1521, %v1862
        %v1864 = vpop.f32.mrb[0].mxu0
        %1865 = vmatprep.mubr.f32.mxu0 0.0
        %1866 = vmatmul.mubr.f32.gmra.mrb[0].mxu0 %v1576
        %v1867 = vpop.f32.mrb[0].mxu0
        %v1868 = vadd.f32 %v1521, %v1867
        %v1869 = vpop.f32.mrb[0].mxu0
        %1870 = vmatprep.mubr.f32.mxu0 0.0
        %1871 = vmatmul.mubr.f32.gmra.mrb[0].mxu0 %v1579
        %v1872 = vpop.f32.mrb[0].mxu0
        %v1873 = vadd.f32 %v1521, %v1872
        %v1874 = vpop.f32.mrb[0].mxu0
        %1875 = vmatprep.mubr.f32.mxu0 0.0
        %1876 = vmatmul.mubr.f32.gmra.mrb[0].mxu0 %v1582
        %v1877 = vpop.f32.mrb[0].mxu0
        %v1878 = vadd.f32 %v1521, %v1877
        %v1879 = vpop.f32.mrb[0].mxu0
        %1880 = vmatprep.mubr.f32.mxu0 0.0
        %1881 = vmatmul.mubr.f32.gmra.mrb[0].mxu0 %v1585
        %v1882 = vpop.f32.mrb[0].mxu0
        %v1883 = vadd.f32 %v1521, %v1882
        %v1884 = vpop.f32.mrb[0].mxu0
        %1885 = vmatprep.mubr.f32.mxu0 0.0
        %1886 = vmatmul.mubr.f32.gmra.mrb[0].mxu0 %v1588
        %v1887 = vpop.f32.mrb[0].mxu0
        %v1888 = vadd.f32 %v1521, %v1887
        %v1889 = vpop.f32.mrb[0].mxu0
        %1890 = vmatprep.mubr.f32.mxu0 0.0
        %1891 = vmatmul.mubr.f32.gmra.mrb[0].mxu0 %v1591
        %v1892 = vpop.f32.mrb[0].mxu0
        %v1893 = vadd.f32 %v1521, %v1892
        %v1894 = vpop.f32.mrb[0].mxu0
        %1895 = vmatprep.mubr.f32.mxu0 0.0
        %1896 = vmatmul.mubr.f32.gmra.mrb[0].mxu0 %v1594
        %v1897 = vpop.f32.mrb[0].mxu0
        %v1898 = vadd.f32 %v1521, %v1897
        %v1899 = vpop.f32.mrb[0].mxu0
        %1900 = vmatprep.mubr.f32.mxu0 0.0
        %1901 = vmatmul.mubr.f32.gmra.mrb[0].mxu0 %v1597
        %v1902 = vpop.f32.mrb[0].mxu0
        %v1903 = vadd.f32 %v1521, %v1902
        %v1904 = vpop.f32.mrb[0].mxu0
        %1905 = vmatprep.mubr.f32.mxu0 0.0
        %1906 = vmatmul.mubr.f32.gmra.mrb[0].mxu0 %v1600
        %v1907 = vpop.f32.mrb[0].mxu0
        %v1908 = vadd.f32 %v1521, %v1907
        %v1909 = vpop.f32.mrb[0].mxu0
        %1910 = vmatprep.mubr.f32.mxu0 0.0
        %1911 = vmatmul.mubr.f32.gmra.mrb[0].mxu0 %v1603
        %v1912 = vpop.f32.mrb[0].mxu0
        %v1913 = vadd.f32 %v1521, %v1912
        %v1914 = vpop.f32.mrb[0].mxu0
        %1915 = vmatprep.mubr.f32.mxu0 0.0
        %1916 = vmatmul.mubr.f32.gmra.mrb[0].mxu0 %v1606
        %v1917 = vpop.f32.mrb[0].mxu0
        %v1918 = vadd.f32 %v1521, %v1917
        %v1919 = vpop.f32.mrb[0].mxu0
        %1920 = vmatprep.mubr.f32.mxu0 0.0
        %1921 = vmatmul.mubr.f32.gmra.mrb[0].mxu0 %v1609
        %v1922 = vpop.f32.mrb[0].mxu0
        %v1923 = vadd.f32 %v1521, %v1922
        %v1924 = vpop.f32.mrb[0].mxu0
        %1925 = vmatprep.mubr.f32.mxu0 0.0
        %1926 = vmatmul.mubr.f32.gmra.mrb[0].mxu0 %v1612
        %v1927 = vpop.f32.mrb[0].mxu0
        %v1928 = vadd.f32 %v1521, %v1927
        %v1929 = vpop.f32.mrb[0].mxu0
        %1930 = vmatprep.mubr.f32.mxu0 0.0
        %1931 = vmatmul.mubr.f32.gmra.mrb[0].mxu0 %v1615
        %v1932 = vpop.f32.mrb[0].mxu0
        %v1933 = vadd.f32 %v1521, %v1932
        %v1934 = vpop.f32.mrb[0].mxu0
        %1935 = vmatprep.mubr.f32.mxu0 0.0
        %1936 = vmatmul.mubr.f32.gmra.mrb[0].mxu0 %v1618
        %v1937 = vpop.f32.mrb[0].mxu0
        %v1938 = vadd.f32 %v1521, %v1937
        %v1939 = vpop.f32.mrb[0].mxu0
        %1940 = vmatprep.mubr.f32.mxu0 0.0
        %1941 = vmatmul.mubr.f32.gmra.mrb[0].mxu0 %v1621
        %v1942 = vpop.f32.mrb[0].mxu0
        %v1943 = vadd.f32 %v1521, %v1942
        %v1944 = vpop.f32.mrb[0].mxu0
        %1945 = vmatprep.mubr.f32.mxu0 0.0
        %1946 = vmatmul.mubr.f32.gmra.mrb[0].mxu0 %v1624
        %v1947 = vpop.f32.mrb[0].mxu0
        %v1948 = vadd.f32 %v1521, %v1947
        %v1949 = vpop.f32.mrb[0].mxu0
        %1950 = vmatprep.mubr.f32.mxu0 0.0
        %1951 = vmatmul.mubr.f32.gmra.mrb[0].mxu0 %v1627
        %v1952 = vpop.f32.mrb[0].mxu0
        %v1953 = vadd.f32 %v1521, %v1952
        %v1954 = vpop.f32.mrb[0].mxu0
        %1955 = vmatprep.mubr.f32.mxu0 0.0
        %1956 = vmatmul.mubr.f32.gmra.mrb[0].mxu0 %v1630
        %v1957 = vpop.f32.mrb[0].mxu0
        %v1958 = vadd.f32 %v1521, %v1957
        %v1959 = vpop.f32.mrb[0].mxu0
        %1960 = vmatprep.mubr.f32.mxu0 0.0
        %1961 = vmatmul.mubr.f32.gmra.mrb[0].mxu0 %v1633
        %v1962 = vpop.f32.mrb[0].mxu0
        %v1963 = vadd.f32 %v1521, %v1962
        %v1964 = vpop.f32.mrb[0].mxu0
        %1965 = vmatprep.mubr.f32.mxu0 0.0
        %1966 = vmatmul.mubr.f32.gmra.mrb[0].mxu0 %v1636
        %v1967 = vpop.f32.mrb[0].mxu0
        %v1968 = vadd.f32 %v1521, %v1967
        %v1969 = vpop.f32.mrb[0].mxu0
        %1970 = vmatprep.mubr.f32.mxu0 0.0
        %1971 = vmatmul.mubr.f32.gmra.mrb[0].mxu0 %v1639
        %v1972 = vpop.f32.mrb[0].mxu0
        %v1973 = vadd.f32 %v1521, %v1972
        %v1974 = vpop.f32.mrb[0].mxu0
        %1975 = vmatprep.mubr.f32.mxu0 0.0
        %1976 = vmatmul.mubr.f32.gmra.mrb[0].mxu0 %v1642
        %v1977 = vpop.f32.mrb[0].mxu0
        %v1978 = vadd.f32 %v1521, %v1977
        %v1979 = vpop.f32.mrb[0].mxu0
        %1980 = vmatprep.mubr.f32.mxu0 0.0
        %1981 = vmatmul.mubr.f32.gmra.mrb[0].mxu0 %v1645
        %v1982 = vpop.f32.mrb[0].mxu0
        %v1983 = vadd.f32 %v1521, %v1982
        %v1984 = vpop.f32.mrb[0].mxu0
        %1985 = vmatprep.mubr.f32.mxu0 0.0
        %1986 = vmatmul.mubr.f32.gmra.mrb[0].mxu0 %v1648
        %v1987 = vpop.f32.mrb[0].mxu0
        %v1988 = vadd.f32 %v1521, %v1987
        %v1989 = vpop.f32.mrb[0].mxu0
        %1990 = vmatprep.mubr.f32.mxu0 0.0
        %1991 = vmatmul.mubr.f32.gmra.mrb[0].mxu0 %v1651
        %v1992 = vpop.f32.mrb[0].mxu0
        %v1993 = vadd.f32 %v1521, %v1992
        %v1994 = vpop.f32.mrb[0].mxu0
        %1995 = vmatprep.mubr.f32.mxu0 0.0
        %1996 = vmatmul.mubr.f32.gmra.mrb[0].mxu0 %v1654
        %v1997 = vpop.f32.mrb[0].mxu0
        %v1998 = vadd.f32 %v1521, %v1997
        %v1999 = vpop.f32.mrb[0].mxu0
        %2000 = vmatprep.mubr.f32.mxu0 0.0
        %2001 = vmatmul.mubr.f32.gmra.mrb[0].mxu0 %v1657
        %v2002 = vpop.f32.mrb[0].mxu0
        %v2003 = vadd.f32 %v1521, %v2002
        %v2004 = vpop.f32.mrb[0].mxu0
        %2005 = vmatprep.mubr.f32.mxu0 0.0
        %2006 = vmatmul.mubr.f32.gmra.mrb[0].mxu0 %v1660
        %v2007 = vpop.f32.mrb[0].mxu0
        %v2008 = vadd.f32 %v1521, %v2007
        %v2009 = vpop.f32.mrb[0].mxu0
        %2010 = vmatprep.mubr.f32.mxu0 0.0
        %2011 = vmatmul.mubr.f32.gmra.mrb[0].mxu0 %v1663
        %v2012 = vpop.f32.mrb[0].mxu0
        %v2013 = vadd.f32 %v1521, %v2012
        %v2014 = vpop.f32.mrb[0].mxu0
        %2015 = vmatprep.mubr.f32.mxu0 0.0
        %2016 = vmatmul.mubr.f32.gmra.mrb[0].mxu0 %v1666
        %v2017 = vpop.f32.mrb[0].mxu0
        %v2018 = vadd.f32 %v1521, %v2017
        %v2019 = vpop.f32.mrb[0].mxu0
        %2020 = vmatprep.mubr.f32.mxu0 0.0
        %2021 = vmatmul.mubr.f32.gmra.mrb[0].mxu0 %v1669
        %v2022 = vpop.f32.mrb[0].mxu0
        %v2023 = vadd.f32 %v1521, %v2022
        %v2024 = vpop.f32.mrb[0].mxu0
        %2025 = vmatprep.mubr.f32.mxu0 0.0
        %2026 = vmatmul.mubr.f32.gmra.mrb[0].mxu0 %v1672
        %v2027 = vpop.f32.mrb[0].mxu0
        %v2028 = vadd.f32 %v1521, %v2027
        %v2029 = vpop.f32.mrb[0].mxu0
        %2030 = vmatprep.mubr.f32.mxu0 0.0
        %2031 = vmatmul.mubr.f32.gmra.mrb[0].mxu0 %v1675
        %v2032 = vpop.f32.mrb[0].mxu0
        %v2033 = vadd.f32 %v1521, %v2032
        %v2034 = vpop.f32.mrb[0].mxu0
        %2035 = vmatprep.mubr.f32.mxu0 0.0
        %2036 = vmatmul.mubr.f32.gmra.mrb[0].mxu0 %v1678
        %v2037 = vpop.f32.mrb[0].mxu0
        %v2038 = vadd.f32 %v1521, %v2037
        %v2039 = vpop.f32.mrb[0].mxu0
        %2040 = vmatprep.mubr.f32.mxu0 0.0
        %2041 = vmatmul.mubr.f32.gmra.mrb[0].mxu0 %v1681
        %v2042 = vpop.f32.mrb[0].mxu0
        %v2043 = vadd.f32 %v1521, %v2042
        %v2044 = vpop.f32.mrb[0].mxu0
        %2045 = vmatprep.mubr.f32.mxu0 0.0
        %2046 = vmatmul.mubr.f32.gmra.mrb[0].mxu0 %v1684
        %v2047 = vpop.f32.mrb[0].mxu0
        %v2048 = vadd.f32 %v1521, %v2047
        %v2049 = vpop.f32.mrb[0].mxu0
        %2050 = vmatprep.mubr.f32.mxu0 0.0
        %2051 = vmatmul.mubr.f32.gmra.mrb[0].mxu0 %v1687
        %v2052 = vpop.f32.mrb[0].mxu0
        %v2053 = vadd.f32 %v1521, %v2052
        %v2054 = vpop.f32.mrb[0].mxu0
        %2055 = vmatprep.mubr.f32.mxu0 0.0
        %2056 = vmatmul.mubr.f32.gmra.mrb[0].mxu0 %v1690
        %v2057 = vpop.f32.mrb[0].mxu0
        %v2058 = vadd.f32 %v1521, %v2057
        %v2059 = vpop.f32.mrb[0].mxu0
        %2060 = vmatprep.mubr.f32.mxu0 0.0
        %2061 = vmatmul.mubr.f32.gmra.mrb[0].mxu0 %v1693
        %v2062 = vpop.f32.mrb[0].mxu0
        %v2063 = vadd.f32 %v1521, %v2062
        %v2064 = vpop.f32.mrb[0].mxu0
        %2065 = vmatprep.mubr.f32.mxu0 0.0
        %2066 = vmatmul.mubr.f32.gmra.mrb[0].mxu0 %v1696
        %v2067 = vpop.f32.mrb[0].mxu0
        %v2068 = vadd.f32 %v1521, %v2067
        %v2069 = vpop.f32.mrb[0].mxu0
        %2070 = vmatprep.mubr.f32.mxu0 0.0
        %2071 = vmatmul.mubr.f32.gmra.mrb[0].mxu0 %v1699
        %v2072 = vpop.f32.mrb[0].mxu0
        %v2073 = vadd.f32 %v1521, %v2072
        %v2074 = vpop.f32.mrb[0].mxu0
        %2075 = vmatprep.mubr.f32.mxu0 0.0
        %2076 = vmatmul.mubr.f32.gmra.mrb[0].mxu0 %v1702
        %v2077 = vpop.f32.mrb[0].mxu0
        %v2078 = vadd.f32 %v1521, %v2077
        %v2079 = vpop.f32.mrb[0].mxu0
        %2080 = vmatprep.mubr.f32.mxu0 0.0
        %2081 = vmatmul.mubr.f32.gmra.mrb[0].mxu0 %v1705
        %v2082 = vpop.f32.mrb[0].mxu0
        %v2083 = vadd.f32 %v1521, %v2082
        %v2084 = vpop.f32.mrb[0].mxu0
        %2085 = vmatprep.mubr.f32.mxu0 0.0
        %2086 = vmatmul.mubr.f32.gmra.mrb[0].mxu0 %v1708
        %v2087 = vpop.f32.mrb[0].mxu0
        %v2088 = vadd.f32 %v1521, %v2087
        %v2089 = vpop.f32.mrb[0].mxu0
        %2090 = vmatprep.mubr.f32.mxu0 0.0
        %2091 = vmatmul.mubr.f32.gmra.mrb[0].mxu0 %v1711
        %v2092 = vpop.f32.mrb[0].mxu0
        %v2093 = vadd.f32 %v1521, %v2092
        %v2094 = vpop.f32.mrb[0].mxu0
        %2095 = vdwg.mxu0
        %vm2096 = vcmask 15360
        %2097 = vst.msk [vmem:[%s145] sm:$0xff] %vm2096, %v1783
        %2098 = vst.msk [vmem:[%s145 + $0x8] sm:$0xff] %vm2096, %v1788
        %2099 = vst.msk [vmem:[%s145 + $0x10] sm:$0xff] %vm2096, %v1793
        %2100 = vst.msk [vmem:[%s145 + $0x18] sm:$0xff] %vm2096, %v1798
        %2101 = vst.msk [vmem:[%s145 + $0x20] sm:$0xff] %vm2096, %v1803
        %2102 = vst.msk [vmem:[%s145 + $0x28] sm:$0xff] %vm2096, %v1808
        %2103 = vst.msk [vmem:[%s145 + $0x30] sm:$0xff] %vm2096, %v1813
        %2104 = vst.msk [vmem:[%s145 + $0x38] sm:$0xff] %vm2096, %v1818
        %2105 = vst.msk [vmem:[%s145 + $0x40] sm:$0xff] %vm2096, %v1823
        %2106 = vst.msk [vmem:[%s145 + $0x48] sm:$0xff] %vm2096, %v1828
        %2107 = vst.msk [vmem:[%s145 + $0x50] sm:$0xff] %vm2096, %v1833
        %2108 = vst.msk [vmem:[%s145 + $0x58] sm:$0xff] %vm2096, %v1838
        %2109 = vst.msk [vmem:[%s145 + $0x60] sm:$0xff] %vm2096, %v1843
        %2110 = vst.msk [vmem:[%s145 + $0x68] sm:$0xff] %vm2096, %v1848
        %2111 = vst.msk [vmem:[%s145 + $0x70] sm:$0xff] %vm2096, %v1853
        %2112 = vst.msk [vmem:[%s145 + $0x78] sm:$0xff] %vm2096, %v1858
        %2113 = vst.msk [vmem:[%s145 + $0x80] sm:$0xff] %vm2096, %v1863
        %2114 = vst.msk [vmem:[%s145 + $0x88] sm:$0xff] %vm2096, %v1868
        %2115 = vst.msk [vmem:[%s145 + $0x90] sm:$0xff] %vm2096, %v1873
        %2116 = vst.msk [vmem:[%s145 + $0x98] sm:$0xff] %vm2096, %v1878
        %2117 = vst.msk [vmem:[%s145 + $0xa0] sm:$0xff] %vm2096, %v1883
        %2118 = vst.msk [vmem:[%s145 + $0xa8] sm:$0xff] %vm2096, %v1888
        %2119 = vst.msk [vmem:[%s145 + $0xb0] sm:$0xff] %vm2096, %v1893
        %2120 = vst.msk [vmem:[%s145 + $0xb8] sm:$0xff] %vm2096, %v1898
        %2121 = vst.msk [vmem:[%s145 + $0xc0] sm:$0xff] %vm2096, %v1903
        %2122 = vst.msk [vmem:[%s145 + $0xc8] sm:$0xff] %vm2096, %v1908
        %2123 = vst.msk [vmem:[%s145 + $0xd0] sm:$0xff] %vm2096, %v1913
        %2124 = vst.msk [vmem:[%s145 + $0xd8] sm:$0xff] %vm2096, %v1918
        %2125 = vst.msk [vmem:[%s145 + $0xe0] sm:$0xff] %vm2096, %v1923
        %2126 = vst.msk [vmem:[%s145 + $0xe8] sm:$0xff] %vm2096, %v1928
        %2127 = vst.msk [vmem:[%s145 + $0xf0] sm:$0xff] %vm2096, %v1933
        %2128 = vst.msk [vmem:[%s145 + $0xf8] sm:$0xff] %vm2096, %v1938
        %2129 = vst.msk [vmem:[%s145 + $0x100] sm:$0xff] %vm2096, %v1943
        %2130 = vst.msk [vmem:[%s145 + $0x108] sm:$0xff] %vm2096, %v1948
        %2131 = vst.msk [vmem:[%s145 + $0x110] sm:$0xff] %vm2096, %v1953
        %2132 = vst.msk [vmem:[%s145 + $0x118] sm:$0xff] %vm2096, %v1958
        %2133 = vst.msk [vmem:[%s145 + $0x120] sm:$0xff] %vm2096, %v1963
        %2134 = vst.msk [vmem:[%s145 + $0x128] sm:$0xff] %vm2096, %v1968
        %2135 = vst.msk [vmem:[%s145 + $0x130] sm:$0xff] %vm2096, %v1973
        %2136 = vst.msk [vmem:[%s145 + $0x138] sm:$0xff] %vm2096, %v1978
        %2137 = vst.msk [vmem:[%s145 + $0x140] sm:$0xff] %vm2096, %v1983
        %2138 = vst.msk [vmem:[%s145 + $0x148] sm:$0xff] %vm2096, %v1988
        %2139 = vst.msk [vmem:[%s145 + $0x150] sm:$0xff] %vm2096, %v1993
        %2140 = vst.msk [vmem:[%s145 + $0x158] sm:$0xff] %vm2096, %v1998
        %2141 = vst.msk [vmem:[%s145 + $0x160] sm:$0xff] %vm2096, %v2003
        %2142 = vst.msk [vmem:[%s145 + $0x168] sm:$0xff] %vm2096, %v2008
        %2143 = vst.msk [vmem:[%s145 + $0x170] sm:$0xff] %vm2096, %v2013
        %2144 = vst.msk [vmem:[%s145 + $0x178] sm:$0xff] %vm2096, %v2018
        %2145 = vst.msk [vmem:[%s145 + $0x180] sm:$0xff] %vm2096, %v2023
        %2146 = vst.msk [vmem:[%s145 + $0x188] sm:$0xff] %vm2096, %v2028
        %2147 = vst.msk [vmem:[%s145 + $0x190] sm:$0xff] %vm2096, %v2033
        %2148 = vst.msk [vmem:[%s145 + $0x198] sm:$0xff] %vm2096, %v2038
        %2149 = vst.msk [vmem:[%s145 + $0x1a0] sm:$0xff] %vm2096, %v2043
        %2150 = vst.msk [vmem:[%s145 + $0x1a8] sm:$0xff] %vm2096, %v2048
        %2151 = vst.msk [vmem:[%s145 + $0x1b0] sm:$0xff] %vm2096, %v2053
        %2152 = vst.msk [vmem:[%s145 + $0x1b8] sm:$0xff] %vm2096, %v2058
        %2153 = vst.msk [vmem:[%s145 + $0x1c0] sm:$0xff] %vm2096, %v2063
        %2154 = vst.msk [vmem:[%s145 + $0x1c8] sm:$0xff] %vm2096, %v2068
        %2155 = vst.msk [vmem:[%s145 + $0x1d0] sm:$0xff] %vm2096, %v2073
        %2156 = vst.msk [vmem:[%s145 + $0x1d8] sm:$0xff] %vm2096, %v2078
        %2157 = vst.msk [vmem:[%s145 + $0x1e0] sm:$0xff] %vm2096, %v2083
        %2158 = vst.msk [vmem:[%s145 + $0x1e8] sm:$0xff] %vm2096, %v2088
        %2159 = vst.msk [vmem:[%s145 + $0x1f0] sm:$0xff] %vm2096, %v2093
        %s2160 = sand.u32 %s68, 1
        %s2161 = sand.u32 %s68, 1
        %s2162 = smul.addr %s2161, 504
        %s2163 = scalar_lea.vmem [#allocation2], %s2162
        // Predicated region
        $region29: #{tpu_custom_call.1} parent=27 // pred_check
          %p2164 = pneg %p78
        $region30: #{tpu_custom_call.1} parent=27 // pred_check_branch
          %2166 = sbr.rel (%p2164) target = $region32
        $region31: #{tpu_custom_call.1} parent=27 // pred_region
          %s2167 = smul.u32 63, %s13
          %s2168 = ssub.s32 125, %s2167
          %p2169 = scmp.lt.s32.totalorder %s2168, 63
          %s2170 = scalar_select %p2169, %s2168, 63
          %s2171 = smul.u32 128, %s2170
          %p2172 = scmp.ne.s32.totalorder 0, %s2171
          %s2173 = smul.addr %s2167, 8
          %s2174 = scalar_lea.vmem %s2, %s2173
          // Predicated region
          $region33: #{tpu_custom_call.1} parent=31 // pred_check
            %p2175 = pneg %p2172
          $region34: #{tpu_custom_call.1} parent=31 // pred_check_branch
            %2177 = sbr.rel (%p2175) target = $region36
          $region35: #{tpu_custom_call.1} parent=31 // pred_region
            // Predicated region
            $region37: #{tpu_custom_call.1} parent=35 // pred_check
              _
            $region38: #{tpu_custom_call.1} parent=35 // pred_check_branch
              %2179 = sbr.rel (0) target = $region40
            $region39: #{tpu_custom_call.1} parent=35 // pred_region
              // Predicated region
              $region59: #{tpu_custom_call.1} parent=39 // pred_check
                _
              $region60: #{tpu_custom_call.1} parent=39 // pred_check_branch
                %2353 = sbr.rel (0) target = $region62
              $region61: #{tpu_custom_call.1} parent=39 // pred_region
                %s2354 = sdiv.u32.pop %s2170, 63
                %s2355 = srem.u32.pop %s2170, 63
                // While loop
                $region63: #{tpu_custom_call.1} parent=61 // loop_pre_header
                  _
                $region64: #{tpu_custom_call.1} parent=61 // loop_header
                  %s2357 = sphi 0, %s2359
                  %p2358 = scmp.ge.s32.totalorder %s2357, %s2354
                  %s2362 = sphi 0, %s2493
                  %s2363 = sphi %s2163, %s2496
                  %s2364 = sphi %s2174, %s2497
                $region65: #{tpu_custom_call.1} parent=61 // loop_header_branch
                  %2361 = sbr.rel (%p2358) target = $region69
                $region66: #{tpu_custom_call.1} parent=61 // loop_body
                  %v2365 = vld [vmem:[%s2363] sm:$0xff]
                  %2366 = vst [vmem:[%s2364] sm:$0xff] %v2365
                  %v2367 = vld [vmem:[%s2363 + $0x8] sm:$0xff]
                  %2368 = vst [vmem:[%s2364 + $0x8] sm:$0xff] %v2367
                  %v2369 = vld [vmem:[%s2363 + $0x10] sm:$0xff]
                  %2370 = vst [vmem:[%s2364 + $0x10] sm:$0xff] %v2369
                  %v2371 = vld [vmem:[%s2363 + $0x18] sm:$0xff]
                  %2372 = vst [vmem:[%s2364 + $0x18] sm:$0xff] %v2371
                  %v2373 = vld [vmem:[%s2363 + $0x20] sm:$0xff]
                  %2374 = vst [vmem:[%s2364 + $0x20] sm:$0xff] %v2373
                  %v2375 = vld [vmem:[%s2363 + $0x28] sm:$0xff]
                  %2376 = vst [vmem:[%s2364 + $0x28] sm:$0xff] %v2375
                  %v2377 = vld [vmem:[%s2363 + $0x30] sm:$0xff]
                  %2378 = vst [vmem:[%s2364 + $0x30] sm:$0xff] %v2377
                  %v2379 = vld [vmem:[%s2363 + $0x38] sm:$0xff]
                  %2380 = vst [vmem:[%s2364 + $0x38] sm:$0xff] %v2379
                  %v2381 = vld [vmem:[%s2363 + $0x40] sm:$0xff]
                  %2382 = vst [vmem:[%s2364 + $0x40] sm:$0xff] %v2381
                  %v2383 = vld [vmem:[%s2363 + $0x48] sm:$0xff]
                  %2384 = vst [vmem:[%s2364 + $0x48] sm:$0xff] %v2383
                  %v2385 = vld [vmem:[%s2363 + $0x50] sm:$0xff]
                  %2386 = vst [vmem:[%s2364 + $0x50] sm:$0xff] %v2385
                  %v2387 = vld [vmem:[%s2363 + $0x58] sm:$0xff]
                  %2388 = vst [vmem:[%s2364 + $0x58] sm:$0xff] %v2387
                  %v2389 = vld [vmem:[%s2363 + $0x60] sm:$0xff]
                  %2390 = vst [vmem:[%s2364 + $0x60] sm:$0xff] %v2389
                  %v2391 = vld [vmem:[%s2363 + $0x68] sm:$0xff]
                  %2392 = vst [vmem:[%s2364 + $0x68] sm:$0xff] %v2391
                  %v2393 = vld [vmem:[%s2363 + $0x70] sm:$0xff]
                  %2394 = vst [vmem:[%s2364 + $0x70] sm:$0xff] %v2393
                  %v2395 = vld [vmem:[%s2363 + $0x78] sm:$0xff]
                  %2396 = vst [vmem:[%s2364 + $0x78] sm:$0xff] %v2395
                  %v2397 = vld [vmem:[%s2363 + $0x80] sm:$0xff]
                  %2398 = vst [vmem:[%s2364 + $0x80] sm:$0xff] %v2397
                  %v2399 = vld [vmem:[%s2363 + $0x88] sm:$0xff]
                  %2400 = vst [vmem:[%s2364 + $0x88] sm:$0xff] %v2399
                  %v2401 = vld [vmem:[%s2363 + $0x90] sm:$0xff]
                  %2402 = vst [vmem:[%s2364 + $0x90] sm:$0xff] %v2401
                  %v2403 = vld [vmem:[%s2363 + $0x98] sm:$0xff]
                  %2404 = vst [vmem:[%s2364 + $0x98] sm:$0xff] %v2403
                  %v2405 = vld [vmem:[%s2363 + $0xa0] sm:$0xff]
                  %2406 = vst [vmem:[%s2364 + $0xa0] sm:$0xff] %v2405
                  %v2407 = vld [vmem:[%s2363 + $0xa8] sm:$0xff]
                  %2408 = vst [vmem:[%s2364 + $0xa8] sm:$0xff] %v2407
                  %v2409 = vld [vmem:[%s2363 + $0xb0] sm:$0xff]
                  %2410 = vst [vmem:[%s2364 + $0xb0] sm:$0xff] %v2409
                  %v2411 = vld [vmem:[%s2363 + $0xb8] sm:$0xff]
                  %2412 = vst [vmem:[%s2364 + $0xb8] sm:$0xff] %v2411
                  %v2413 = vld [vmem:[%s2363 + $0xc0] sm:$0xff]
                  %2414 = vst [vmem:[%s2364 + $0xc0] sm:$0xff] %v2413
                  %v2415 = vld [vmem:[%s2363 + $0xc8] sm:$0xff]
                  %2416 = vst [vmem:[%s2364 + $0xc8] sm:$0xff] %v2415
                  %v2417 = vld [vmem:[%s2363 + $0xd0] sm:$0xff]
                  %2418 = vst [vmem:[%s2364 + $0xd0] sm:$0xff] %v2417
                  %v2419 = vld [vmem:[%s2363 + $0xd8] sm:$0xff]
                  %2420 = vst [vmem:[%s2364 + $0xd8] sm:$0xff] %v2419
                  %v2421 = vld [vmem:[%s2363 + $0xe0] sm:$0xff]
                  %2422 = vst [vmem:[%s2364 + $0xe0] sm:$0xff] %v2421
                  %v2423 = vld [vmem:[%s2363 + $0xe8] sm:$0xff]
                  %2424 = vst [vmem:[%s2364 + $0xe8] sm:$0xff] %v2423
                  %v2425 = vld [vmem:[%s2363 + $0xf0] sm:$0xff]
                  %2426 = vst [vmem:[%s2364 + $0xf0] sm:$0xff] %v2425
                  %v2427 = vld [vmem:[%s2363 + $0xf8] sm:$0xff]
                  %2428 = vst [vmem:[%s2364 + $0xf8] sm:$0xff] %v2427
                  %v2429 = vld [vmem:[%s2363 + $0x100] sm:$0xff]
                  %2430 = vst [vmem:[%s2364 + $0x100] sm:$0xff] %v2429
                  %v2431 = vld [vmem:[%s2363 + $0x108] sm:$0xff]
                  %2432 = vst [vmem:[%s2364 + $0x108] sm:$0xff] %v2431
                  %v2433 = vld [vmem:[%s2363 + $0x110] sm:$0xff]
                  %2434 = vst [vmem:[%s2364 + $0x110] sm:$0xff] %v2433
                  %v2435 = vld [vmem:[%s2363 + $0x118] sm:$0xff]
                  %2436 = vst [vmem:[%s2364 + $0x118] sm:$0xff] %v2435
                  %v2437 = vld [vmem:[%s2363 + $0x120] sm:$0xff]
                  %2438 = vst [vmem:[%s2364 + $0x120] sm:$0xff] %v2437
                  %v2439 = vld [vmem:[%s2363 + $0x128] sm:$0xff]
                  %2440 = vst [vmem:[%s2364 + $0x128] sm:$0xff] %v2439
                  %v2441 = vld [vmem:[%s2363 + $0x130] sm:$0xff]
                  %2442 = vst [vmem:[%s2364 + $0x130] sm:$0xff] %v2441
                  %v2443 = vld [vmem:[%s2363 + $0x138] sm:$0xff]
                  %2444 = vst [vmem:[%s2364 + $0x138] sm:$0xff] %v2443
                  %v2445 = vld [vmem:[%s2363 + $0x140] sm:$0xff]
                  %2446 = vst [vmem:[%s2364 + $0x140] sm:$0xff] %v2445
                  %v2447 = vld [vmem:[%s2363 + $0x148] sm:$0xff]
                  %2448 = vst [vmem:[%s2364 + $0x148] sm:$0xff] %v2447
                  %v2449 = vld [vmem:[%s2363 + $0x150] sm:$0xff]
                  %2450 = vst [vmem:[%s2364 + $0x150] sm:$0xff] %v2449
                  %v2451 = vld [vmem:[%s2363 + $0x158] sm:$0xff]
                  %2452 = vst [vmem:[%s2364 + $0x158] sm:$0xff] %v2451
                  %v2453 = vld [vmem:[%s2363 + $0x160] sm:$0xff]
                  %2454 = vst [vmem:[%s2364 + $0x160] sm:$0xff] %v2453
                  %v2455 = vld [vmem:[%s2363 + $0x168] sm:$0xff]
                  %2456 = vst [vmem:[%s2364 + $0x168] sm:$0xff] %v2455
                  %v2457 = vld [vmem:[%s2363 + $0x170] sm:$0xff]
                  %2458 = vst [vmem:[%s2364 + $0x170] sm:$0xff] %v2457
                  %v2459 = vld [vmem:[%s2363 + $0x178] sm:$0xff]
                  %2460 = vst [vmem:[%s2364 + $0x178] sm:$0xff] %v2459
                  %v2461 = vld [vmem:[%s2363 + $0x180] sm:$0xff]
                  %2462 = vst [vmem:[%s2364 + $0x180] sm:$0xff] %v2461
                  %v2463 = vld [vmem:[%s2363 + $0x188] sm:$0xff]
                  %2464 = vst [vmem:[%s2364 + $0x188] sm:$0xff] %v2463
                  %v2465 = vld [vmem:[%s2363 + $0x190] sm:$0xff]
                  %2466 = vst [vmem:[%s2364 + $0x190] sm:$0xff] %v2465
                  %v2467 = vld [vmem:[%s2363 + $0x198] sm:$0xff]
                  %2468 = vst [vmem:[%s2364 + $0x198] sm:$0xff] %v2467
                  %v2469 = vld [vmem:[%s2363 + $0x1a0] sm:$0xff]
                  %2470 = vst [vmem:[%s2364 + $0x1a0] sm:$0xff] %v2469
                  %v2471 = vld [vmem:[%s2363 + $0x1a8] sm:$0xff]
                  %2472 = vst [vmem:[%s2364 + $0x1a8] sm:$0xff] %v2471
                  %v2473 = vld [vmem:[%s2363 + $0x1b0] sm:$0xff]
                  %2474 = vst [vmem:[%s2364 + $0x1b0] sm:$0xff] %v2473
                  %v2475 = vld [vmem:[%s2363 + $0x1b8] sm:$0xff]
                  %2476 = vst [vmem:[%s2364 + $0x1b8] sm:$0xff] %v2475
                  %v2477 = vld [vmem:[%s2363 + $0x1c0] sm:$0xff]
                  %2478 = vst [vmem:[%s2364 + $0x1c0] sm:$0xff] %v2477
                  %v2479 = vld [vmem:[%s2363 + $0x1c8] sm:$0xff]
                  %2480 = vst [vmem:[%s2364 + $0x1c8] sm:$0xff] %v2479
                  %v2481 = vld [vmem:[%s2363 + $0x1d0] sm:$0xff]
                  %2482 = vst [vmem:[%s2364 + $0x1d0] sm:$0xff] %v2481
                  %v2483 = vld [vmem:[%s2363 + $0x1d8] sm:$0xff]
                  %2484 = vst [vmem:[%s2364 + $0x1d8] sm:$0xff] %v2483
                  %v2485 = vld [vmem:[%s2363 + $0x1e0] sm:$0xff]
                  %2486 = vst [vmem:[%s2364 + $0x1e0] sm:$0xff] %v2485
                  %v2487 = vld [vmem:[%s2363 + $0x1e8] sm:$0xff]
                  %2488 = vst [vmem:[%s2364 + $0x1e8] sm:$0xff] %v2487
                  %v2489 = vld [vmem:[%s2363 + $0x1f0] sm:$0xff]
                  %2490 = vst [vmem:[%s2364 + $0x1f0] sm:$0xff] %v2489
                  %s2491 = sadd.s32 1, %s2362
                  %p2492 = scmp.ge.s32.totalorder %s2491, %s2354
                  %s2493 = scalar_select %p2492, 0, %s2491
                  %s2494 = smul.u32 %s2493, 504
                  %s2495 = smul.u32 %s2493, 504
                  %s2496 = scalar_lea.vmem %s2163, %s2494 [#allocation2]
                  %s2497 = scalar_lea.vmem %s2174, %s2495
                $region67: #{tpu_custom_call.1} parent=61 // loop_footer
                  %s2359 = sadd.s32 %s2357, 1
                $region68: #{tpu_custom_call.1} parent=61 // loop_footer_branch
                  %2356 = sbr.rel target = $region64
                $region69: #{tpu_custom_call.1} parent=61 // loop_exit
                  _
                %s2498 = sdiv.u32.pop %s2170, 63
                %s2499 = srem.u32.pop %s2170, 63
                %s2500 = smul.u32 %s2498, 63
                %s2501 = smul.u32 8, %s2500
                %s2502 = scalar_lea.vmem %s2163, %s2501 [#allocation2]
                %s2503 = smul.u32 8, %s2500
                %s2504 = scalar_lea.vmem %s2174, %s2503
                // While loop
                $region70: #{tpu_custom_call.1} parent=61 // loop_pre_header
                  _
                $region71: #{tpu_custom_call.1} parent=61 // loop_header
                  %s2506 = sphi 0, %s2508
                  %p2507 = scmp.ge.s32.totalorder %s2506, %s2499
                  %s2511 = sphi 0, %s2518
                  %s2512 = sphi %s2502, %s2521
                  %s2513 = sphi %s2504, %s2522
                $region72: #{tpu_custom_call.1} parent=61 // loop_header_branch
                  %2510 = sbr.rel (%p2507) target = $region76
                $region73: #{tpu_custom_call.1} parent=61 // loop_body
                  %v2514 = vld [vmem:[%s2512] sm:$0xff]
                  %2515 = vst [vmem:[%s2513] sm:$0xff] %v2514
                  %s2516 = sadd.s32 1, %s2511
                  %p2517 = scmp.ge.s32.totalorder %s2516, %s2499
                  %s2518 = scalar_select %p2517, 0, %s2516
                  %s2519 = smul.u32 %s2518, 8
                  %s2520 = smul.u32 %s2518, 8
                  %s2521 = scalar_lea.vmem %s2502, %s2519 [#allocation2]
                  %s2522 = scalar_lea.vmem %s2504, %s2520
                $region74: #{tpu_custom_call.1} parent=61 // loop_footer
                  %s2508 = sadd.s32 %s2506, 1
                $region75: #{tpu_custom_call.1} parent=61 // loop_footer_branch
                  %2505 = sbr.rel target = $region71
                $region76: #{tpu_custom_call.1} parent=61 // loop_exit
                  _
              $region62: #{tpu_custom_call.1} parent=39 // pred_fallthru
                _
              // Predicated region
              $region77: #{tpu_custom_call.1} parent=39 // pred_check
                _
              $region78: #{tpu_custom_call.1} parent=39 // pred_check_branch
                %2524 = sbr.rel target = $region80
              $region79: #{tpu_custom_call.1} parent=39 // pred_region
                _
              $region80: #{tpu_custom_call.1} parent=39 // pred_fallthru
                _
            $region40: #{tpu_custom_call.1} parent=35 // pred_fallthru
              _
            // Predicated region
            $region41: #{tpu_custom_call.1} parent=35 // pred_check
              _
            $region42: #{tpu_custom_call.1} parent=35 // pred_check_branch
              %2181 = sbr.rel target = $region44
            $region43: #{tpu_custom_call.1} parent=35 // pred_region
              %s2183 = sdiv.u32.pop %s2170, 63
              %s2184 = srem.u32.pop %s2170, 63
              // While loop
              $region45: #{tpu_custom_call.1} parent=43 // loop_pre_header
                _
              $region46: #{tpu_custom_call.1} parent=43 // loop_header
                %s2186 = sphi 0, %s2188
                %p2187 = scmp.ge.s32.totalorder %s2186, %s2183
                %s2191 = sphi 0, %s2322
                %s2192 = sphi %s2163, %s2325
                %s2193 = sphi %s2174, %s2326
              $region47: #{tpu_custom_call.1} parent=43 // loop_header_branch
                %2190 = sbr.rel (%p2187) target = $region51
              $region48: #{tpu_custom_call.1} parent=43 // loop_body
                %v2194 = vld [vmem:[%s2192] sm:$0xff]
                %2195 = vst [vmem:[%s2193] sm:$0xff] %v2194
                %v2196 = vld [vmem:[%s2192 + $0x8] sm:$0xff]
                %2197 = vst [vmem:[%s2193 + $0x8] sm:$0xff] %v2196
                %v2198 = vld [vmem:[%s2192 + $0x10] sm:$0xff]
                %2199 = vst [vmem:[%s2193 + $0x10] sm:$0xff] %v2198
                %v2200 = vld [vmem:[%s2192 + $0x18] sm:$0xff]
                %2201 = vst [vmem:[%s2193 + $0x18] sm:$0xff] %v2200
                %v2202 = vld [vmem:[%s2192 + $0x20] sm:$0xff]
                %2203 = vst [vmem:[%s2193 + $0x20] sm:$0xff] %v2202
                %v2204 = vld [vmem:[%s2192 + $0x28] sm:$0xff]
                %2205 = vst [vmem:[%s2193 + $0x28] sm:$0xff] %v2204
                %v2206 = vld [vmem:[%s2192 + $0x30] sm:$0xff]
                %2207 = vst [vmem:[%s2193 + $0x30] sm:$0xff] %v2206
                %v2208 = vld [vmem:[%s2192 + $0x38] sm:$0xff]
                %2209 = vst [vmem:[%s2193 + $0x38] sm:$0xff] %v2208
                %v2210 = vld [vmem:[%s2192 + $0x40] sm:$0xff]
                %2211 = vst [vmem:[%s2193 + $0x40] sm:$0xff] %v2210
                %v2212 = vld [vmem:[%s2192 + $0x48] sm:$0xff]
                %2213 = vst [vmem:[%s2193 + $0x48] sm:$0xff] %v2212
                %v2214 = vld [vmem:[%s2192 + $0x50] sm:$0xff]
                %2215 = vst [vmem:[%s2193 + $0x50] sm:$0xff] %v2214
                %v2216 = vld [vmem:[%s2192 + $0x58] sm:$0xff]
                %2217 = vst [vmem:[%s2193 + $0x58] sm:$0xff] %v2216
                %v2218 = vld [vmem:[%s2192 + $0x60] sm:$0xff]
                %2219 = vst [vmem:[%s2193 + $0x60] sm:$0xff] %v2218
                %v2220 = vld [vmem:[%s2192 + $0x68] sm:$0xff]
                %2221 = vst [vmem:[%s2193 + $0x68] sm:$0xff] %v2220
                %v2222 = vld [vmem:[%s2192 + $0x70] sm:$0xff]
                %2223 = vst [vmem:[%s2193 + $0x70] sm:$0xff] %v2222
                %v2224 = vld [vmem:[%s2192 + $0x78] sm:$0xff]
                %2225 = vst [vmem:[%s2193 + $0x78] sm:$0xff] %v2224
                %v2226 = vld [vmem:[%s2192 + $0x80] sm:$0xff]
                %2227 = vst [vmem:[%s2193 + $0x80] sm:$0xff] %v2226
                %v2228 = vld [vmem:[%s2192 + $0x88] sm:$0xff]
                %2229 = vst [vmem:[%s2193 + $0x88] sm:$0xff] %v2228
                %v2230 = vld [vmem:[%s2192 + $0x90] sm:$0xff]
                %2231 = vst [vmem:[%s2193 + $0x90] sm:$0xff] %v2230
                %v2232 = vld [vmem:[%s2192 + $0x98] sm:$0xff]
                %2233 = vst [vmem:[%s2193 + $0x98] sm:$0xff] %v2232
                %v2234 = vld [vmem:[%s2192 + $0xa0] sm:$0xff]
                %2235 = vst [vmem:[%s2193 + $0xa0] sm:$0xff] %v2234
                %v2236 = vld [vmem:[%s2192 + $0xa8] sm:$0xff]
                %2237 = vst [vmem:[%s2193 + $0xa8] sm:$0xff] %v2236
                %v2238 = vld [vmem:[%s2192 + $0xb0] sm:$0xff]
                %2239 = vst [vmem:[%s2193 + $0xb0] sm:$0xff] %v2238
                %v2240 = vld [vmem:[%s2192 + $0xb8] sm:$0xff]
                %2241 = vst [vmem:[%s2193 + $0xb8] sm:$0xff] %v2240
                %v2242 = vld [vmem:[%s2192 + $0xc0] sm:$0xff]
                %2243 = vst [vmem:[%s2193 + $0xc0] sm:$0xff] %v2242
                %v2244 = vld [vmem:[%s2192 + $0xc8] sm:$0xff]
                %2245 = vst [vmem:[%s2193 + $0xc8] sm:$0xff] %v2244
                %v2246 = vld [vmem:[%s2192 + $0xd0] sm:$0xff]
                %2247 = vst [vmem:[%s2193 + $0xd0] sm:$0xff] %v2246
                %v2248 = vld [vmem:[%s2192 + $0xd8] sm:$0xff]
                %2249 = vst [vmem:[%s2193 + $0xd8] sm:$0xff] %v2248
                %v2250 = vld [vmem:[%s2192 + $0xe0] sm:$0xff]
                %2251 = vst [vmem:[%s2193 + $0xe0] sm:$0xff] %v2250
                %v2252 = vld [vmem:[%s2192 + $0xe8] sm:$0xff]
                %2253 = vst [vmem:[%s2193 + $0xe8] sm:$0xff] %v2252
                %v2254 = vld [vmem:[%s2192 + $0xf0] sm:$0xff]
                %2255 = vst [vmem:[%s2193 + $0xf0] sm:$0xff] %v2254
                %v2256 = vld [vmem:[%s2192 + $0xf8] sm:$0xff]
                %2257 = vst [vmem:[%s2193 + $0xf8] sm:$0xff] %v2256
                %v2258 = vld [vmem:[%s2192 + $0x100] sm:$0xff]
                %2259 = vst [vmem:[%s2193 + $0x100] sm:$0xff] %v2258
                %v2260 = vld [vmem:[%s2192 + $0x108] sm:$0xff]
                %2261 = vst [vmem:[%s2193 + $0x108] sm:$0xff] %v2260
                %v2262 = vld [vmem:[%s2192 + $0x110] sm:$0xff]
                %2263 = vst [vmem:[%s2193 + $0x110] sm:$0xff] %v2262
                %v2264 = vld [vmem:[%s2192 + $0x118] sm:$0xff]
                %2265 = vst [vmem:[%s2193 + $0x118] sm:$0xff] %v2264
                %v2266 = vld [vmem:[%s2192 + $0x120] sm:$0xff]
                %2267 = vst [vmem:[%s2193 + $0x120] sm:$0xff] %v2266
                %v2268 = vld [vmem:[%s2192 + $0x128] sm:$0xff]
                %2269 = vst [vmem:[%s2193 + $0x128] sm:$0xff] %v2268
                %v2270 = vld [vmem:[%s2192 + $0x130] sm:$0xff]
                %2271 = vst [vmem:[%s2193 + $0x130] sm:$0xff] %v2270
                %v2272 = vld [vmem:[%s2192 + $0x138] sm:$0xff]
                %2273 = vst [vmem:[%s2193 + $0x138] sm:$0xff] %v2272
                %v2274 = vld [vmem:[%s2192 + $0x140] sm:$0xff]
                %2275 = vst [vmem:[%s2193 + $0x140] sm:$0xff] %v2274
                %v2276 = vld [vmem:[%s2192 + $0x148] sm:$0xff]
                %2277 = vst [vmem:[%s2193 + $0x148] sm:$0xff] %v2276
                %v2278 = vld [vmem:[%s2192 + $0x150] sm:$0xff]
                %2279 = vst [vmem:[%s2193 + $0x150] sm:$0xff] %v2278
                %v2280 = vld [vmem:[%s2192 + $0x158] sm:$0xff]
                %2281 = vst [vmem:[%s2193 + $0x158] sm:$0xff] %v2280
                %v2282 = vld [vmem:[%s2192 + $0x160] sm:$0xff]
                %2283 = vst [vmem:[%s2193 + $0x160] sm:$0xff] %v2282
                %v2284 = vld [vmem:[%s2192 + $0x168] sm:$0xff]
                %2285 = vst [vmem:[%s2193 + $0x168] sm:$0xff] %v2284
                %v2286 = vld [vmem:[%s2192 + $0x170] sm:$0xff]
                %2287 = vst [vmem:[%s2193 + $0x170] sm:$0xff] %v2286
                %v2288 = vld [vmem:[%s2192 + $0x178] sm:$0xff]
                %2289 = vst [vmem:[%s2193 + $0x178] sm:$0xff] %v2288
                %v2290 = vld [vmem:[%s2192 + $0x180] sm:$0xff]
                %2291 = vst [vmem:[%s2193 + $0x180] sm:$0xff] %v2290
                %v2292 = vld [vmem:[%s2192 + $0x188] sm:$0xff]
                %2293 = vst [vmem:[%s2193 + $0x188] sm:$0xff] %v2292
                %v2294 = vld [vmem:[%s2192 + $0x190] sm:$0xff]
                %2295 = vst [vmem:[%s2193 + $0x190] sm:$0xff] %v2294
                %v2296 = vld [vmem:[%s2192 + $0x198] sm:$0xff]
                %2297 = vst [vmem:[%s2193 + $0x198] sm:$0xff] %v2296
                %v2298 = vld [vmem:[%s2192 + $0x1a0] sm:$0xff]
                %2299 = vst [vmem:[%s2193 + $0x1a0] sm:$0xff] %v2298
                %v2300 = vld [vmem:[%s2192 + $0x1a8] sm:$0xff]
                %2301 = vst [vmem:[%s2193 + $0x1a8] sm:$0xff] %v2300
                %v2302 = vld [vmem:[%s2192 + $0x1b0] sm:$0xff]
                %2303 = vst [vmem:[%s2193 + $0x1b0] sm:$0xff] %v2302
                %v2304 = vld [vmem:[%s2192 + $0x1b8] sm:$0xff]
                %2305 = vst [vmem:[%s2193 + $0x1b8] sm:$0xff] %v2304
                %v2306 = vld [vmem:[%s2192 + $0x1c0] sm:$0xff]
                %2307 = vst [vmem:[%s2193 + $0x1c0] sm:$0xff] %v2306
                %v2308 = vld [vmem:[%s2192 + $0x1c8] sm:$0xff]
                %2309 = vst [vmem:[%s2193 + $0x1c8] sm:$0xff] %v2308
                %v2310 = vld [vmem:[%s2192 + $0x1d0] sm:$0xff]
                %2311 = vst [vmem:[%s2193 + $0x1d0] sm:$0xff] %v2310
                %v2312 = vld [vmem:[%s2192 + $0x1d8] sm:$0xff]
                %2313 = vst [vmem:[%s2193 + $0x1d8] sm:$0xff] %v2312
                %v2314 = vld [vmem:[%s2192 + $0x1e0] sm:$0xff]
                %2315 = vst [vmem:[%s2193 + $0x1e0] sm:$0xff] %v2314
                %v2316 = vld [vmem:[%s2192 + $0x1e8] sm:$0xff]
                %2317 = vst [vmem:[%s2193 + $0x1e8] sm:$0xff] %v2316
                %v2318 = vld [vmem:[%s2192 + $0x1f0] sm:$0xff]
                %2319 = vst [vmem:[%s2193 + $0x1f0] sm:$0xff] %v2318
                %s2320 = sadd.s32 1, %s2191
                %p2321 = scmp.ge.s32.totalorder %s2320, %s2183
                %s2322 = scalar_select %p2321, 0, %s2320
                %s2323 = smul.u32 %s2322, 504
                %s2324 = smul.u32 %s2322, 504
                %s2325 = scalar_lea.vmem %s2163, %s2323 [#allocation2]
                %s2326 = scalar_lea.vmem %s2174, %s2324
              $region49: #{tpu_custom_call.1} parent=43 // loop_footer
                %s2188 = sadd.s32 %s2186, 1
              $region50: #{tpu_custom_call.1} parent=43 // loop_footer_branch
                %2185 = sbr.rel target = $region46
              $region51: #{tpu_custom_call.1} parent=43 // loop_exit
                _
              %s2327 = sdiv.u32.pop %s2170, 63
              %s2328 = srem.u32.pop %s2170, 63
              %s2329 = smul.u32 %s2327, 63
              %s2330 = smul.u32 8, %s2329
              %s2331 = scalar_lea.vmem %s2163, %s2330 [#allocation2]
              %s2332 = smul.u32 8, %s2329
              %s2333 = scalar_lea.vmem %s2174, %s2332
              // While loop
              $region52: #{tpu_custom_call.1} parent=43 // loop_pre_header
                _
              $region53: #{tpu_custom_call.1} parent=43 // loop_header
                %s2335 = sphi 0, %s2337
                %p2336 = scmp.ge.s32.totalorder %s2335, %s2328
                %s2340 = sphi 0, %s2347
                %s2341 = sphi %s2331, %s2350
                %s2342 = sphi %s2333, %s2351
              $region54: #{tpu_custom_call.1} parent=43 // loop_header_branch
                %2339 = sbr.rel (%p2336) target = $region58
              $region55: #{tpu_custom_call.1} parent=43 // loop_body
                %v2343 = vld [vmem:[%s2341] sm:$0xff]
                %2344 = vst [vmem:[%s2342] sm:$0xff] %v2343
                %s2345 = sadd.s32 1, %s2340
                %p2346 = scmp.ge.s32.totalorder %s2345, %s2328
                %s2347 = scalar_select %p2346, 0, %s2345
                %s2348 = smul.u32 %s2347, 8
                %s2349 = smul.u32 %s2347, 8
                %s2350 = scalar_lea.vmem %s2331, %s2348 [#allocation2]
                %s2351 = scalar_lea.vmem %s2333, %s2349
              $region56: #{tpu_custom_call.1} parent=43 // loop_footer
                %s2337 = sadd.s32 %s2335, 1
              $region57: #{tpu_custom_call.1} parent=43 // loop_footer_branch
                %2334 = sbr.rel target = $region53
              $region58: #{tpu_custom_call.1} parent=43 // loop_exit
                _
            $region44: #{tpu_custom_call.1} parent=35 // pred_fallthru
              _
          $region36: #{tpu_custom_call.1} parent=31 // pred_fallthru
            _
          %2525 = vnop
        $region32: #{tpu_custom_call.1} parent=27 // pred_fallthru
          _
      $region28: #{tpu_custom_call.1} parent=5 // pred_fallthru
        _
      %p2526 = scmp.le.s32.totalorder 2, %s8
      // Predicated region
      $region81: #{tpu_custom_call.1} parent=5 // pred_check
        %p2527 = pneg %p2526
      $region82: #{tpu_custom_call.1} parent=5 // pred_check_branch
        %2529 = sbr.rel (%p2527) target = $region84
      $region83: #{tpu_custom_call.1} parent=5 // pred_region
        %s2530 = ssub.s32 %s8, 2
        // Predicated region
        $region85: #{tpu_custom_call.1} parent=83 // pred_check
          %p2531 = pneg %p84
        $region86: #{tpu_custom_call.1} parent=83 // pred_check_branch
          %2533 = sbr.rel (%p2531) target = $region88
        $region87: #{tpu_custom_call.1} parent=83 // pred_region
          %s2534 = sand.u32 %s69, 1
          %s2535 = sand.u32 %s69, 1
          %s2536 = smul.addr %s2535, 504
          %s2537 = scalar_lea.vmem [#allocation2], %s2536
        $region88: #{tpu_custom_call.1} parent=83 // pred_fallthru
          _
      $region84: #{tpu_custom_call.1} parent=5 // pred_fallthru
        _
    $region6: #{tpu_custom_call.1} parent=1 // loop_footer
      %s12 = sadd.s32 1, %s8
    $region7: #{tpu_custom_call.1} parent=1 // loop_footer_branch
      %7 = sbr.rel target = $region3
    $region8: #{tpu_custom_call.1} parent=1 // loop_exit
      _

</llo_original>
